<compile_context>
chip_gen: v5e
topology: v5e:2x2
jax: 0.10.0
libtpu: 0.0.40
codegen_flags: <defaults>
</compile_context>

<pallas_src>
import jax
import jax.numpy as jnp
from jax.experimental import pallas as pl
from jax.experimental.pallas import tpu as pltpu  # noqa: F401  (TPU backend)

EPS = 1e-5


def fused_add_relu_conv1x1_bn_kernel(x1_ref, x2_ref, w_ref, g_ref, b_ref, o_ref):
    # add + relu on the VPU, kept in f32 (v5e has no bf16 VPU).
    y = jnp.maximum(x1_ref[...] + x2_ref[...], 0.0)                 # (Cin, S) f32

    # 1x1 conv on the MXU in its native (M,K)x(K,N) form:
    #   Z[Cout, S] = W[Cout, Cin] @ Y[Cin, S]
    # bf16 operands (cast in-kernel, hides under DMA/MXU), f32 accumulation.
    z = jnp.dot(w_ref[...].astype(jnp.bfloat16), y.astype(jnp.bfloat16),
                preferred_element_type=jnp.float32)                 # (Cout, S) f32

    # BatchNorm (training-mode forward): per-output-channel stats over S=N*H*W,
    # single fused statistics pass (sum + sum-of-squares).
    s = z.shape[1]
    inv_s = 1.0 / s
    mean = jnp.sum(z, axis=1, keepdims=True) * inv_s                # (Cout, 1)
    m2 = jnp.sum(z * z, axis=1, keepdims=True) * inv_s              # (Cout, 1)
    var = jnp.maximum(m2 - mean * mean, 0.0)                        # guard cancellation
    inv = jax.lax.rsqrt(var + EPS)                                  # EUP, 400 elems

    # Fold gamma / mean into one per-channel scale+bias (only C elems), then a
    # single multiply-add over the tile.  Output stays (Cout, S) so the
    # wrapper reshape to NCHW is free for N == 1.
    scale = inv * g_ref[...]                                        # (Cout, 1)
    bias = b_ref[...] - mean * scale                                # (Cout, 1)
    o_ref[...] = z * scale + bias                                   # (Cout, S)


@jax.jit
def fused_forward(x181, x189, weight, gamma, beta):
    """x181, x189: (N, C, H, W) float32; weight: (Cout, Cin) float32; gamma/beta: (C,)."""
    N, C, H, W = x181.shape
    S = N * H * W

    if N == 1:
        # NCHW -> (C, S) is a pure reshape when N == 1 (no HBM transpose).
        x1 = x181.reshape(C, S)
        x2 = x189.reshape(C, S)
    else:
        x1 = jnp.transpose(x181, (1, 0, 2, 3)).reshape(C, S)
        x2 = jnp.transpose(x189, (1, 0, 2, 3)).reshape(C, S)

    g = gamma.reshape(C, 1).astype(jnp.float32)
    b = beta.reshape(C, 1).astype(jnp.float32)

    bytes_accessed = (2 * C * S * 4      # x1, x2 f32
                      + C * C * 4        # weight f32
                      + 2 * C * 4        # gamma, beta
                      + C * S * 4)       # output f32
    cost = pl.CostEstimate(flops=2 * C * C * S + 6 * C * S,
                           transcendentals=C,
                           bytes_accessed=bytes_accessed)

    out_cs = pl.pallas_call(
        fused_add_relu_conv1x1_bn_kernel,
        out_shape=jax.ShapeDtypeStruct((C, S), jnp.float32),
        in_specs=[
            pl.BlockSpec((C, S), lambda: (0, 0)),
            pl.BlockSpec((C, S), lambda: (0, 0)),
            pl.BlockSpec((C, C), lambda: (0, 0)),
            pl.BlockSpec((C, 1), lambda: (0, 0)),
            pl.BlockSpec((C, 1), lambda: (0, 0)),
        ],
        out_specs=pl.BlockSpec((C, S), lambda: (0, 0)),
        cost_estimate=cost,
    )(x1, x2, weight, g, b)

    if N == 1:
        # (Cout, S) -> (1, Cout, H, W): pure metadata reshape, no transpose.
        return out_cs.reshape(N, C, H, W)
    # Generic path: S axis is ordered (N, H, W) row-major.
    return jnp.transpose(out_cs.reshape(C, N, H, W), (1, 0, 2, 3))


if __name__ == "__main__":
    key = jax.random.PRNGKey(0)
    k1, k2, k3, k4, k5 = jax.random.split(key, 5)

    N, C, H, W = 1, 400, 7, 7
    x181 = jax.random.normal(k1, (N, C, H, W), dtype=jnp.float32)
    x189 = jax.random.normal(k2, (N, C, H, W), dtype=jnp.float32)

    # Deterministic parameter init (synthetic, not a checkpoint load).
    weight = jax.random.normal(k3, (C, C), dtype=jnp.float32) * 0.05  # 1x1 conv weight
    gamma = jnp.ones((C,), dtype=jnp.float32) + 0.1 * jax.random.normal(k4, (C,), dtype=jnp.float32)
    beta = 0.1 * jax.random.normal(k5, (C,), dtype=jnp.float32)

    out = fused_forward(x181, x189, weight, gamma, beta)
    jax.block_until_ready(out)

    # Pure-JAX f32 reference of the same math:
    # add -> relu -> 1x1 conv -> training-mode BatchNorm (batch stats, biased var).
    y_ref = jnp.maximum(x181 + x189, 0.0)
    z_ref = jnp.einsum("oc,nchw->nohw", weight, y_ref)
    m_ref = jnp.mean(z_ref, axis=(0, 2, 3), keepdims=True)
    v_ref = jnp.mean((z_ref - m_ref) ** 2, axis=(0, 2, 3), keepdims=True)
    ref = (z_ref - m_ref) / jnp.sqrt(v_ref + EPS) * gamma.reshape(1, C, 1, 1) + beta.reshape(1, C, 1, 1)

    assert out.shape == (N, C, H, W)
    # bf16 MXU operands (f32 accumulation) on a unit-variance-normalized output:
    # allow a few e-2 absolute tolerance vs the pure-f32 reference.
    assert jnp.max(jnp.abs(out - ref)) < 5e-2

    # TODO(synk): running_mean / running_var buffer updates (momentum=0.1) are not
    # emitted; this kernel returns the forward activation only.
    print("KERNEL_OK")
</pallas_src>

<mosaic_0001>
module attributes {stable_mosaic.version = 11 : i64} {
  func.func @fused_add_relu_conv1x1_bn_kernel(%arg0: memref<400x49xf32, #tpu.memory_space<vmem>>, %arg1: memref<400x49xf32, #tpu.memory_space<vmem>>, %arg2: memref<400x400xf32, #tpu.memory_space<vmem>>, %arg3: memref<400x1xf32, #tpu.memory_space<vmem>>, %arg4: memref<400x1xf32, #tpu.memory_space<vmem>>, %arg5: memref<400x49xf32, #tpu.memory_space<vmem>>) attributes {dimension_semantics = [], scalar_prefetch = 0 : i64, scratch_operands = 0 : i64, tpu.core_type = #tpu.core_type<tc>} {
    %c0 = arith.constant 0 : index
    %c0_0 = arith.constant 0 : index
    %0 = vector.load %arg0[%c0, %c0_0] : memref<400x49xf32, #tpu.memory_space<vmem>>, vector<400x49xf32>
    %c0_1 = arith.constant 0 : index
    %c0_2 = arith.constant 0 : index
    %1 = vector.load %arg1[%c0_1, %c0_2] : memref<400x49xf32, #tpu.memory_space<vmem>>, vector<400x49xf32>
    %2 = arith.addf %0, %1 : vector<400x49xf32>
    %cst = arith.constant 0.000000e+00 : f32
    %3 = vector.broadcast %cst : f32 to vector<400x49xf32>
    %4 = arith.maximumf %2, %3 : vector<400x49xf32>
    %c0_3 = arith.constant 0 : index
    %c0_4 = arith.constant 0 : index
    %5 = vector.load %arg2[%c0_3, %c0_4] : memref<400x400xf32, #tpu.memory_space<vmem>>, vector<400x400xf32>
    %6 = arith.truncf %5 : vector<400x400xf32> to vector<400x400xbf16>
    %7 = arith.truncf %4 : vector<400x49xf32> to vector<400x49xbf16>
    %cst_5 = arith.constant dense<0.000000e+00> : vector<400x49xf32>
    %8 = tpu.matmul %6, %7, %cst_5 {dimension_numbers = #tpu.dot_dimension_numbers<[1], [0], [0], [1], [0, 0, 1, 1], [], []>} : vector<400x400xbf16>, vector<400x49xbf16>, vector<400x49xf32> -> vector<400x49xf32>
    %cst_6 = arith.constant dense<0.000000e+00> : vector<400xf32>
    %9 = vector.multi_reduction <add>, %8, %cst_6 [1] : vector<400x49xf32> to vector<400xf32>
    %10 = vector.shape_cast %9 : vector<400xf32> to vector<400x1xf32>
    %cst_7 = arith.constant 0.0204081628 : f32
    %11 = vector.broadcast %cst_7 : f32 to vector<400x1xf32>
    %12 = arith.mulf %10, %11 : vector<400x1xf32>
    %13 = arith.mulf %8, %8 : vector<400x49xf32>
    %cst_8 = arith.constant dense<0.000000e+00> : vector<400xf32>
    %14 = vector.multi_reduction <add>, %13, %cst_8 [1] : vector<400x49xf32> to vector<400xf32>
    %15 = vector.shape_cast %14 : vector<400xf32> to vector<400x1xf32>
    %cst_9 = arith.constant 0.0204081628 : f32
    %16 = vector.broadcast %cst_9 : f32 to vector<400x1xf32>
    %17 = arith.mulf %15, %16 : vector<400x1xf32>
    %18 = arith.mulf %12, %12 : vector<400x1xf32>
    %19 = arith.subf %17, %18 : vector<400x1xf32>
    %cst_10 = arith.constant 0.000000e+00 : f32
    %20 = vector.broadcast %cst_10 : f32 to vector<400x1xf32>
    %21 = arith.maximumf %19, %20 : vector<400x1xf32>
    %cst_11 = arith.constant 9.99999974E-6 : f32
    %22 = vector.broadcast %cst_11 : f32 to vector<400x1xf32>
    %23 = arith.addf %21, %22 : vector<400x1xf32>
    %24 = math.rsqrt %23 : vector<400x1xf32>
    %c0_12 = arith.constant 0 : index
    %c0_13 = arith.constant 0 : index
    %25 = vector.load %arg3[%c0_12, %c0_13] : memref<400x1xf32, #tpu.memory_space<vmem>>, vector<400x1xf32>
    %26 = arith.mulf %24, %25 : vector<400x1xf32>
    %c0_14 = arith.constant 0 : index
    %c0_15 = arith.constant 0 : index
    %27 = vector.load %arg4[%c0_14, %c0_15] : memref<400x1xf32, #tpu.memory_space<vmem>>, vector<400x1xf32>
    %28 = arith.mulf %12, %26 : vector<400x1xf32>
    %29 = arith.subf %27, %28 : vector<400x1xf32>
    %30 = vector.broadcast %26 : vector<400x1xf32> to vector<400x49xf32>
    %31 = arith.mulf %8, %30 : vector<400x49xf32>
    %32 = vector.broadcast %29 : vector<400x1xf32> to vector<400x49xf32>
    %33 = arith.addf %31, %32 : vector<400x49xf32>
    %c0_16 = arith.constant 0 : index
    %c0_17 = arith.constant 0 : index
    %34 = vector.load %arg5[%c0_16, %c0_17] : memref<400x49xf32, #tpu.memory_space<vmem>>, vector<400x49xf32>
    tpu.vector_store %arg5[%c0_16, %c0_17], %33 {strides = array<i32>} : memref<400x49xf32, #tpu.memory_space<vmem>>, vector<400x49xf32>,
    return
  }
}

</mosaic_0001>

<llo_original>
// kernel: fused_forward.1
$region0: #{fused_forward.1}
  #allocation0 [shape = 'u32[]', space=smem, size = 0x4, offset = 0x4, fixed_abs, tag = 'smem constant byte address 0x4 - core index']
  #allocation1 [shape = 'u32[72,128]{1,0:T(1,128)}', space=vmem, size = 0x9000, scoped, tag = 'internal scratch']
  %s0 = inlined_call_operand.vmem [shape: f32[400,49], index: 0, kind: input, shape index: {}]
  %s1 = inlined_call_operand.vmem [shape: f32[400,49], index: 1, kind: input, shape index: {}]
  %s2 = inlined_call_operand.vmem [shape: f32[400,400], index: 2, kind: input, shape index: {}]
  %s3 = inlined_call_operand.vmem [shape: f32[400,1], index: 3, kind: input, shape index: {}]
  %s4 = inlined_call_operand.vmem [shape: f32[400,1], index: 4, kind: input, shape index: {}]
  %s5 = inlined_call_operand.vmem [shape: f32[400,49], index: 5, kind: output, shape index: {}]
  %s6 = sld [smem:[#allocation0]]
  $region30: #{fused_forward.1} parent=0
    _
  %s8 = ssub.s32 1, %s6
  %s9 = scalar_select 0, %s8, %s6
  // Predicated region
  $region2: #{fused_forward.1} parent=0 // pred_check
    _
  $region3: #{fused_forward.1} parent=0 // pred_check_branch
    %11 = sbr.rel (0) target = $region5
  $region4: #{fused_forward.1} parent=0 // pred_region
    _
  $region5: #{fused_forward.1} parent=0 // pred_fallthru
    _
  // Predicated region
  $region6: #{fused_forward.1} parent=0 // pred_check
    _
  $region7: #{fused_forward.1} parent=0 // pred_check_branch
    %13 = sbr.rel (0) target = $region9
  $region8: #{fused_forward.1} parent=0 // pred_region
    _
  $region9: #{fused_forward.1} parent=0 // pred_fallthru
    _
  // Predicated region
  $region10: #{fused_forward.1} parent=0 // pred_check
    _
  $region11: #{fused_forward.1} parent=0 // pred_check_branch
    %15 = sbr.rel (0) target = $region13
  $region12: #{fused_forward.1} parent=0 // pred_region
    _
  $region13: #{fused_forward.1} parent=0 // pred_fallthru
    _
  // Predicated region
  $region14: #{fused_forward.1} parent=0 // pred_check
    _
  $region15: #{fused_forward.1} parent=0 // pred_check_branch
    %17 = sbr.rel (0) target = $region17
  $region16: #{fused_forward.1} parent=0 // pred_region
    _
  $region17: #{fused_forward.1} parent=0 // pred_fallthru
    _
  // Predicated region
  $region18: #{fused_forward.1} parent=0 // pred_check
    _
  $region19: #{fused_forward.1} parent=0 // pred_check_branch
    %19 = sbr.rel (0) target = $region21
  $region20: #{fused_forward.1} parent=0 // pred_region
    _
  $region21: #{fused_forward.1} parent=0 // pred_fallthru
    _
  %v21 = vld [vmem:[%s0] sm:$0xff]
  %v22 = vld [vmem:[%s0 + $0x8] sm:$0xff]
  %v23 = vld [vmem:[%s0 + $0x10] sm:$0xff]
  %v24 = vld [vmem:[%s0 + $0x18] sm:$0xff]
  %v25 = vld [vmem:[%s0 + $0x20] sm:$0xff]
  %v26 = vld [vmem:[%s0 + $0x28] sm:$0xff]
  %v27 = vld [vmem:[%s0 + $0x30] sm:$0xff]
  %v28 = vld [vmem:[%s0 + $0x38] sm:$0xff]
  %v29 = vld [vmem:[%s0 + $0x40] sm:$0xff]
  %v30 = vld [vmem:[%s0 + $0x48] sm:$0xff]
  %v31 = vld [vmem:[%s0 + $0x50] sm:$0xff]
  %v32 = vld [vmem:[%s0 + $0x58] sm:$0xff]
  %v33 = vld [vmem:[%s0 + $0x60] sm:$0xff]
  %v34 = vld [vmem:[%s0 + $0x68] sm:$0xff]
  %v35 = vld [vmem:[%s0 + $0x70] sm:$0xff]
  %v36 = vld [vmem:[%s0 + $0x78] sm:$0xff]
  %v37 = vld [vmem:[%s0 + $0x80] sm:$0xff]
  %v38 = vld [vmem:[%s0 + $0x88] sm:$0xff]
  %v39 = vld [vmem:[%s0 + $0x90] sm:$0xff]
  %v40 = vld [vmem:[%s0 + $0x98] sm:$0xff]
  %v41 = vld [vmem:[%s0 + $0xa0] sm:$0xff]
  %v42 = vld [vmem:[%s0 + $0xa8] sm:$0xff]
  %v43 = vld [vmem:[%s0 + $0xb0] sm:$0xff]
  %v44 = vld [vmem:[%s0 + $0xb8] sm:$0xff]
  %v45 = vld [vmem:[%s0 + $0xc0] sm:$0xff]
  %v46 = vld [vmem:[%s0 + $0xc8] sm:$0xff]
  %v47 = vld [vmem:[%s0 + $0xd0] sm:$0xff]
  %v48 = vld [vmem:[%s0 + $0xd8] sm:$0xff]
  %v49 = vld [vmem:[%s0 + $0xe0] sm:$0xff]
  %v50 = vld [vmem:[%s0 + $0xe8] sm:$0xff]
  %v51 = vld [vmem:[%s0 + $0xf0] sm:$0xff]
  %v52 = vld [vmem:[%s0 + $0xf8] sm:$0xff]
  %v53 = vld [vmem:[%s0 + $0x100] sm:$0xff]
  %v54 = vld [vmem:[%s0 + $0x108] sm:$0xff]
  %v55 = vld [vmem:[%s0 + $0x110] sm:$0xff]
  %v56 = vld [vmem:[%s0 + $0x118] sm:$0xff]
  %v57 = vld [vmem:[%s0 + $0x120] sm:$0xff]
  %v58 = vld [vmem:[%s0 + $0x128] sm:$0xff]
  %v59 = vld [vmem:[%s0 + $0x130] sm:$0xff]
  %v60 = vld [vmem:[%s0 + $0x138] sm:$0xff]
  %v61 = vld [vmem:[%s0 + $0x140] sm:$0xff]
  %v62 = vld [vmem:[%s0 + $0x148] sm:$0xff]
  %v63 = vld [vmem:[%s0 + $0x150] sm:$0xff]
  %v64 = vld [vmem:[%s0 + $0x158] sm:$0xff]
  %v65 = vld [vmem:[%s0 + $0x160] sm:$0xff]
  %v66 = vld [vmem:[%s0 + $0x168] sm:$0xff]
  %v67 = vld [vmem:[%s0 + $0x170] sm:$0xff]
  %v68 = vld [vmem:[%s0 + $0x178] sm:$0xff]
  %v69 = vld [vmem:[%s0 + $0x180] sm:$0xff]
  %v70 = vld [vmem:[%s0 + $0x188] sm:$0xff]
  %v71 = vld [vmem:[%s1] sm:$0xff]
  %v72 = vld [vmem:[%s1 + $0x8] sm:$0xff]
  %v73 = vld [vmem:[%s1 + $0x10] sm:$0xff]
  %v74 = vld [vmem:[%s1 + $0x18] sm:$0xff]
  %v75 = vld [vmem:[%s1 + $0x20] sm:$0xff]
  %v76 = vld [vmem:[%s1 + $0x28] sm:$0xff]
  %v77 = vld [vmem:[%s1 + $0x30] sm:$0xff]
  %v78 = vld [vmem:[%s1 + $0x38] sm:$0xff]
  %v79 = vld [vmem:[%s1 + $0x40] sm:$0xff]
  %v80 = vld [vmem:[%s1 + $0x48] sm:$0xff]
  %v81 = vld [vmem:[%s1 + $0x50] sm:$0xff]
  %v82 = vld [vmem:[%s1 + $0x58] sm:$0xff]
  %v83 = vld [vmem:[%s1 + $0x60] sm:$0xff]
  %v84 = vld [vmem:[%s1 + $0x68] sm:$0xff]
  %v85 = vld [vmem:[%s1 + $0x70] sm:$0xff]
  %v86 = vld [vmem:[%s1 + $0x78] sm:$0xff]
  %v87 = vld [vmem:[%s1 + $0x80] sm:$0xff]
  %v88 = vld [vmem:[%s1 + $0x88] sm:$0xff]
  %v89 = vld [vmem:[%s1 + $0x90] sm:$0xff]
  %v90 = vld [vmem:[%s1 + $0x98] sm:$0xff]
  %v91 = vld [vmem:[%s1 + $0xa0] sm:$0xff]
  %v92 = vld [vmem:[%s1 + $0xa8] sm:$0xff]
  %v93 = vld [vmem:[%s1 + $0xb0] sm:$0xff]
  %v94 = vld [vmem:[%s1 + $0xb8] sm:$0xff]
  %v95 = vld [vmem:[%s1 + $0xc0] sm:$0xff]
  %v96 = vld [vmem:[%s1 + $0xc8] sm:$0xff]
  %v97 = vld [vmem:[%s1 + $0xd0] sm:$0xff]
  %v98 = vld [vmem:[%s1 + $0xd8] sm:$0xff]
  %v99 = vld [vmem:[%s1 + $0xe0] sm:$0xff]
  %v100 = vld [vmem:[%s1 + $0xe8] sm:$0xff]
  %v101 = vld [vmem:[%s1 + $0xf0] sm:$0xff]
  %v102 = vld [vmem:[%s1 + $0xf8] sm:$0xff]
  %v103 = vld [vmem:[%s1 + $0x100] sm:$0xff]
  %v104 = vld [vmem:[%s1 + $0x108] sm:$0xff]
  %v105 = vld [vmem:[%s1 + $0x110] sm:$0xff]
  %v106 = vld [vmem:[%s1 + $0x118] sm:$0xff]
  %v107 = vld [vmem:[%s1 + $0x120] sm:$0xff]
  %v108 = vld [vmem:[%s1 + $0x128] sm:$0xff]
  %v109 = vld [vmem:[%s1 + $0x130] sm:$0xff]
  %v110 = vld [vmem:[%s1 + $0x138] sm:$0xff]
  %v111 = vld [vmem:[%s1 + $0x140] sm:$0xff]
  %v112 = vld [vmem:[%s1 + $0x148] sm:$0xff]
  %v113 = vld [vmem:[%s1 + $0x150] sm:$0xff]
  %v114 = vld [vmem:[%s1 + $0x158] sm:$0xff]
  %v115 = vld [vmem:[%s1 + $0x160] sm:$0xff]
  %v116 = vld [vmem:[%s1 + $0x168] sm:$0xff]
  %v117 = vld [vmem:[%s1 + $0x170] sm:$0xff]
  %v118 = vld [vmem:[%s1 + $0x178] sm:$0xff]
  %v119 = vld [vmem:[%s1 + $0x180] sm:$0xff]
  %v120 = vld [vmem:[%s1 + $0x188] sm:$0xff]
  %v121 = vadd.f32 %v21, %v71
  %v122 = vadd.f32 %v22, %v72
  %v123 = vadd.f32 %v23, %v73
  %v124 = vadd.f32 %v24, %v74
  %v125 = vadd.f32 %v25, %v75
  %v126 = vadd.f32 %v26, %v76
  %v127 = vadd.f32 %v27, %v77
  %v128 = vadd.f32 %v28, %v78
  %v129 = vadd.f32 %v29, %v79
  %v130 = vadd.f32 %v30, %v80
  %v131 = vadd.f32 %v31, %v81
  %v132 = vadd.f32 %v32, %v82
  %v133 = vadd.f32 %v33, %v83
  %v134 = vadd.f32 %v34, %v84
  %v135 = vadd.f32 %v35, %v85
  %v136 = vadd.f32 %v36, %v86
  %v137 = vadd.f32 %v37, %v87
  %v138 = vadd.f32 %v38, %v88
  %v139 = vadd.f32 %v39, %v89
  %v140 = vadd.f32 %v40, %v90
  %v141 = vadd.f32 %v41, %v91
  %v142 = vadd.f32 %v42, %v92
  %v143 = vadd.f32 %v43, %v93
  %v144 = vadd.f32 %v44, %v94
  %v145 = vadd.f32 %v45, %v95
  %v146 = vadd.f32 %v46, %v96
  %v147 = vadd.f32 %v47, %v97
  %v148 = vadd.f32 %v48, %v98
  %v149 = vadd.f32 %v49, %v99
  %v150 = vadd.f32 %v50, %v100
  %v151 = vadd.f32 %v51, %v101
  %v152 = vadd.f32 %v52, %v102
  %v153 = vadd.f32 %v53, %v103
  %v154 = vadd.f32 %v54, %v104
  %v155 = vadd.f32 %v55, %v105
  %v156 = vadd.f32 %v56, %v106
  %v157 = vadd.f32 %v57, %v107
  %v158 = vadd.f32 %v58, %v108
  %v159 = vadd.f32 %v59, %v109
  %v160 = vadd.f32 %v60, %v110
  %v161 = vadd.f32 %v61, %v111
  %v162 = vadd.f32 %v62, %v112
  %v163 = vadd.f32 %v63, %v113
  %v164 = vadd.f32 %v64, %v114
  %v165 = vadd.f32 %v65, %v115
  %v166 = vadd.f32 %v66, %v116
  %v167 = vadd.f32 %v67, %v117
  %v168 = vadd.f32 %v68, %v118
  %v169 = vadd.f32 %v69, %v119
  %v170 = vadd.f32 %v70, %v120
  %v171 = vmax.f32 %v121, 0.0
  %v172 = vmax.f32 %v122, 0.0
  %v173 = vmax.f32 %v123, 0.0
  %v174 = vmax.f32 %v124, 0.0
  %v175 = vmax.f32 %v125, 0.0
  %v176 = vmax.f32 %v126, 0.0
  %v177 = vmax.f32 %v127, 0.0
  %v178 = vmax.f32 %v128, 0.0
  %v179 = vmax.f32 %v129, 0.0
  %v180 = vmax.f32 %v130, 0.0
  %v181 = vmax.f32 %v131, 0.0
  %v182 = vmax.f32 %v132, 0.0
  %v183 = vmax.f32 %v133, 0.0
  %v184 = vmax.f32 %v134, 0.0
  %v185 = vmax.f32 %v135, 0.0
  %v186 = vmax.f32 %v136, 0.0
  %v187 = vmax.f32 %v137, 0.0
  %v188 = vmax.f32 %v138, 0.0
  %v189 = vmax.f32 %v139, 0.0
  %v190 = vmax.f32 %v140, 0.0
  %v191 = vmax.f32 %v141, 0.0
  %v192 = vmax.f32 %v142, 0.0
  %v193 = vmax.f32 %v143, 0.0
  %v194 = vmax.f32 %v144, 0.0
  %v195 = vmax.f32 %v145, 0.0
  %v196 = vmax.f32 %v146, 0.0
  %v197 = vmax.f32 %v147, 0.0
  %v198 = vmax.f32 %v148, 0.0
  %v199 = vmax.f32 %v149, 0.0
  %v200 = vmax.f32 %v150, 0.0
  %v201 = vmax.f32 %v151, 0.0
  %v202 = vmax.f32 %v152, 0.0
  %v203 = vmax.f32 %v153, 0.0
  %v204 = vmax.f32 %v154, 0.0
  %v205 = vmax.f32 %v155, 0.0
  %v206 = vmax.f32 %v156, 0.0
  %v207 = vmax.f32 %v157, 0.0
  %v208 = vmax.f32 %v158, 0.0
  %v209 = vmax.f32 %v159, 0.0
  %v210 = vmax.f32 %v160, 0.0
  %v211 = vmax.f32 %v161, 0.0
  %v212 = vmax.f32 %v162, 0.0
  %v213 = vmax.f32 %v163, 0.0
  %v214 = vmax.f32 %v164, 0.0
  %v215 = vmax.f32 %v165, 0.0
  %v216 = vmax.f32 %v166, 0.0
  %v217 = vmax.f32 %v167, 0.0
  %v218 = vmax.f32 %v168, 0.0
  %v219 = vmax.f32 %v169, 0.0
  %v220 = vmax.f32 %v170, 0.0
  %v221 = vld [vmem:[%s2] sm:$0xff]
  %v222 = vld [vmem:[%s2 + $0x8] sm:$0xff]
  %v223 = vld [vmem:[%s2 + $0x10] sm:$0xff]
  %v224 = vld [vmem:[%s2 + $0x18] sm:$0xff]
  %v225 = vld [vmem:[%s2 + $0x20] sm:$0xff]
  %v226 = vld [vmem:[%s2 + $0x28] sm:$0xff]
  %v227 = vld [vmem:[%s2 + $0x30] sm:$0xff]
  %v228 = vld [vmem:[%s2 + $0x38] sm:$0xff]
  %v229 = vld [vmem:[%s2 + $0x40] sm:$0xff]
  %v230 = vld [vmem:[%s2 + $0x48] sm:$0xff]
  %v231 = vld [vmem:[%s2 + $0x50] sm:$0xff]
  %v232 = vld [vmem:[%s2 + $0x58] sm:$0xff]
  %v233 = vld [vmem:[%s2 + $0x60] sm:$0xff]
  %v234 = vld [vmem:[%s2 + $0x68] sm:$0xff]
  %v235 = vld [vmem:[%s2 + $0x70] sm:$0xff]
  %v236 = vld [vmem:[%s2 + $0x78] sm:$0xff]
  %v237 = vld [vmem:[%s2 + $0x80] sm:$0xff]
  %v238 = vld [vmem:[%s2 + $0x88] sm:$0xff]
  %v239 = vld [vmem:[%s2 + $0x90] sm:$0xff]
  %v240 = vld [vmem:[%s2 + $0x98] sm:$0xff]
  %v241 = vld [vmem:[%s2 + $0xa0] sm:$0xff]
  %v242 = vld [vmem:[%s2 + $0xa8] sm:$0xff]
  %v243 = vld [vmem:[%s2 + $0xb0] sm:$0xff]
  %v244 = vld [vmem:[%s2 + $0xb8] sm:$0xff]
  %v245 = vld [vmem:[%s2 + $0xc0] sm:$0xff]
  %v246 = vld [vmem:[%s2 + $0xc8] sm:$0xff]
  %v247 = vld [vmem:[%s2 + $0xd0] sm:$0xff]
  %v248 = vld [vmem:[%s2 + $0xd8] sm:$0xff]
  %v249 = vld [vmem:[%s2 + $0xe0] sm:$0xff]
  %v250 = vld [vmem:[%s2 + $0xe8] sm:$0xff]
  %v251 = vld [vmem:[%s2 + $0xf0] sm:$0xff]
  %v252 = vld [vmem:[%s2 + $0xf8] sm:$0xff]
  %v253 = vld [vmem:[%s2 + $0x100] sm:$0xff]
  %v254 = vld [vmem:[%s2 + $0x108] sm:$0xff]
  %v255 = vld [vmem:[%s2 + $0x110] sm:$0xff]
  %v256 = vld [vmem:[%s2 + $0x118] sm:$0xff]
  %v257 = vld [vmem:[%s2 + $0x120] sm:$0xff]
  %v258 = vld [vmem:[%s2 + $0x128] sm:$0xff]
  %v259 = vld [vmem:[%s2 + $0x130] sm:$0xff]
  %v260 = vld [vmem:[%s2 + $0x138] sm:$0xff]
  %v261 = vld [vmem:[%s2 + $0x140] sm:$0xff]
  %v262 = vld [vmem:[%s2 + $0x148] sm:$0xff]
  %v263 = vld [vmem:[%s2 + $0x150] sm:$0xff]
  %v264 = vld [vmem:[%s2 + $0x158] sm:$0xff]
  %v265 = vld [vmem:[%s2 + $0x160] sm:$0xff]
  %v266 = vld [vmem:[%s2 + $0x168] sm:$0xff]
  %v267 = vld [vmem:[%s2 + $0x170] sm:$0xff]
  %v268 = vld [vmem:[%s2 + $0x178] sm:$0xff]
  %v269 = vld [vmem:[%s2 + $0x180] sm:$0xff]
  %v270 = vld [vmem:[%s2 + $0x188] sm:$0xff]
  %v271 = vld [vmem:[%s2 + $0x190] sm:$0xff]
  %v272 = vld [vmem:[%s2 + $0x198] sm:$0xff]
  %v273 = vld [vmem:[%s2 + $0x1a0] sm:$0xff]
  %v274 = vld [vmem:[%s2 + $0x1a8] sm:$0xff]
  %v275 = vld [vmem:[%s2 + $0x1b0] sm:$0xff]
  %v276 = vld [vmem:[%s2 + $0x1b8] sm:$0xff]
  %v277 = vld [vmem:[%s2 + $0x1c0] sm:$0xff]
  %v278 = vld [vmem:[%s2 + $0x1c8] sm:$0xff]
  %v279 = vld [vmem:[%s2 + $0x1d0] sm:$0xff]
  %v280 = vld [vmem:[%s2 + $0x1d8] sm:$0xff]
  %v281 = vld [vmem:[%s2 + $0x1e0] sm:$0xff]
  %v282 = vld [vmem:[%s2 + $0x1e8] sm:$0xff]
  %v283 = vld [vmem:[%s2 + $0x1f0] sm:$0xff]
  %v284 = vld [vmem:[%s2 + $0x1f8] sm:$0xff]
  %v285 = vld [vmem:[%s2 + $0x200] sm:$0xff]
  %v286 = vld [vmem:[%s2 + $0x208] sm:$0xff]
  %v287 = vld [vmem:[%s2 + $0x210] sm:$0xff]
  %v288 = vld [vmem:[%s2 + $0x218] sm:$0xff]
  %v289 = vld [vmem:[%s2 + $0x220] sm:$0xff]
  %v290 = vld [vmem:[%s2 + $0x228] sm:$0xff]
  %v291 = vld [vmem:[%s2 + $0x230] sm:$0xff]
  %v292 = vld [vmem:[%s2 + $0x238] sm:$0xff]
  %v293 = vld [vmem:[%s2 + $0x240] sm:$0xff]
  %v294 = vld [vmem:[%s2 + $0x248] sm:$0xff]
  %v295 = vld [vmem:[%s2 + $0x250] sm:$0xff]
  %v296 = vld [vmem:[%s2 + $0x258] sm:$0xff]
  %v297 = vld [vmem:[%s2 + $0x260] sm:$0xff]
  %v298 = vld [vmem:[%s2 + $0x268] sm:$0xff]
  %v299 = vld [vmem:[%s2 + $0x270] sm:$0xff]
  %v300 = vld [vmem:[%s2 + $0x278] sm:$0xff]
  %v301 = vld [vmem:[%s2 + $0x280] sm:$0xff]
  %v302 = vld [vmem:[%s2 + $0x288] sm:$0xff]
  %v303 = vld [vmem:[%s2 + $0x290] sm:$0xff]
  %v304 = vld [vmem:[%s2 + $0x298] sm:$0xff]
  %v305 = vld [vmem:[%s2 + $0x2a0] sm:$0xff]
  %v306 = vld [vmem:[%s2 + $0x2a8] sm:$0xff]
  %v307 = vld [vmem:[%s2 + $0x2b0] sm:$0xff]
  %v308 = vld [vmem:[%s2 + $0x2b8] sm:$0xff]
  %v309 = vld [vmem:[%s2 + $0x2c0] sm:$0xff]
  %v310 = vld [vmem:[%s2 + $0x2c8] sm:$0xff]
  %v311 = vld [vmem:[%s2 + $0x2d0] sm:$0xff]
  %v312 = vld [vmem:[%s2 + $0x2d8] sm:$0xff]
  %v313 = vld [vmem:[%s2 + $0x2e0] sm:$0xff]
  %v314 = vld [vmem:[%s2 + $0x2e8] sm:$0xff]
  %v315 = vld [vmem:[%s2 + $0x2f0] sm:$0xff]
  %v316 = vld [vmem:[%s2 + $0x2f8] sm:$0xff]
  %v317 = vld [vmem:[%s2 + $0x300] sm:$0xff]
  %v318 = vld [vmem:[%s2 + $0x308] sm:$0xff]
  %v319 = vld [vmem:[%s2 + $0x310] sm:$0xff]
  %v320 = vld [vmem:[%s2 + $0x318] sm:$0xff]
  %v321 = vld [vmem:[%s2 + $0x320] sm:$0xff]
  %v322 = vld [vmem:[%s2 + $0x328] sm:$0xff]
  %v323 = vld [vmem:[%s2 + $0x330] sm:$0xff]
  %v324 = vld [vmem:[%s2 + $0x338] sm:$0xff]
  %v325 = vld [vmem:[%s2 + $0x340] sm:$0xff]
  %v326 = vld [vmem:[%s2 + $0x348] sm:$0xff]
  %v327 = vld [vmem:[%s2 + $0x350] sm:$0xff]
  %v328 = vld [vmem:[%s2 + $0x358] sm:$0xff]
  %v329 = vld [vmem:[%s2 + $0x360] sm:$0xff]
  %v330 = vld [vmem:[%s2 + $0x368] sm:$0xff]
  %v331 = vld [vmem:[%s2 + $0x370] sm:$0xff]
  %v332 = vld [vmem:[%s2 + $0x378] sm:$0xff]
  %v333 = vld [vmem:[%s2 + $0x380] sm:$0xff]
  %v334 = vld [vmem:[%s2 + $0x388] sm:$0xff]
  %v335 = vld [vmem:[%s2 + $0x390] sm:$0xff]
  %v336 = vld [vmem:[%s2 + $0x398] sm:$0xff]
  %v337 = vld [vmem:[%s2 + $0x3a0] sm:$0xff]
  %v338 = vld [vmem:[%s2 + $0x3a8] sm:$0xff]
  %v339 = vld [vmem:[%s2 + $0x3b0] sm:$0xff]
  %v340 = vld [vmem:[%s2 + $0x3b8] sm:$0xff]
  %v341 = vld [vmem:[%s2 + $0x3c0] sm:$0xff]
  %v342 = vld [vmem:[%s2 + $0x3c8] sm:$0xff]
  %v343 = vld [vmem:[%s2 + $0x3d0] sm:$0xff]
  %v344 = vld [vmem:[%s2 + $0x3d8] sm:$0xff]
  %v345 = vld [vmem:[%s2 + $0x3e0] sm:$0xff]
  %v346 = vld [vmem:[%s2 + $0x3e8] sm:$0xff]
  %v347 = vld [vmem:[%s2 + $0x3f0] sm:$0xff]
  %v348 = vld [vmem:[%s2 + $0x3f8] sm:$0xff]
  %v349 = vld [vmem:[%s2 + $0x400] sm:$0xff]
  %v350 = vld [vmem:[%s2 + $0x408] sm:$0xff]
  %v351 = vld [vmem:[%s2 + $0x410] sm:$0xff]
  %v352 = vld [vmem:[%s2 + $0x418] sm:$0xff]
  %v353 = vld [vmem:[%s2 + $0x420] sm:$0xff]
  %v354 = vld [vmem:[%s2 + $0x428] sm:$0xff]
  %v355 = vld [vmem:[%s2 + $0x430] sm:$0xff]
  %v356 = vld [vmem:[%s2 + $0x438] sm:$0xff]
  %v357 = vld [vmem:[%s2 + $0x440] sm:$0xff]
  %v358 = vld [vmem:[%s2 + $0x448] sm:$0xff]
  %v359 = vld [vmem:[%s2 + $0x450] sm:$0xff]
  %v360 = vld [vmem:[%s2 + $0x458] sm:$0xff]
  %v361 = vld [vmem:[%s2 + $0x460] sm:$0xff]
  %v362 = vld [vmem:[%s2 + $0x468] sm:$0xff]
  %v363 = vld [vmem:[%s2 + $0x470] sm:$0xff]
  %v364 = vld [vmem:[%s2 + $0x478] sm:$0xff]
  %v365 = vld [vmem:[%s2 + $0x480] sm:$0xff]
  %v366 = vld [vmem:[%s2 + $0x488] sm:$0xff]
  %v367 = vld [vmem:[%s2 + $0x490] sm:$0xff]
  %v368 = vld [vmem:[%s2 + $0x498] sm:$0xff]
  %v369 = vld [vmem:[%s2 + $0x4a0] sm:$0xff]
  %v370 = vld [vmem:[%s2 + $0x4a8] sm:$0xff]
  %v371 = vld [vmem:[%s2 + $0x4b0] sm:$0xff]
  %v372 = vld [vmem:[%s2 + $0x4b8] sm:$0xff]
  %v373 = vld [vmem:[%s2 + $0x4c0] sm:$0xff]
  %v374 = vld [vmem:[%s2 + $0x4c8] sm:$0xff]
  %v375 = vld [vmem:[%s2 + $0x4d0] sm:$0xff]
  %v376 = vld [vmem:[%s2 + $0x4d8] sm:$0xff]
  %v377 = vld [vmem:[%s2 + $0x4e0] sm:$0xff]
  %v378 = vld [vmem:[%s2 + $0x4e8] sm:$0xff]
  %v379 = vld [vmem:[%s2 + $0x4f0] sm:$0xff]
  %v380 = vld [vmem:[%s2 + $0x4f8] sm:$0xff]
  %v381 = vld [vmem:[%s2 + $0x500] sm:$0xff]
  %v382 = vld [vmem:[%s2 + $0x508] sm:$0xff]
  %v383 = vld [vmem:[%s2 + $0x510] sm:$0xff]
  %v384 = vld [vmem:[%s2 + $0x518] sm:$0xff]
  %v385 = vld [vmem:[%s2 + $0x520] sm:$0xff]
  %v386 = vld [vmem:[%s2 + $0x528] sm:$0xff]
  %v387 = vld [vmem:[%s2 + $0x530] sm:$0xff]
  %v388 = vld [vmem:[%s2 + $0x538] sm:$0xff]
  %v389 = vld [vmem:[%s2 + $0x540] sm:$0xff]
  %v390 = vld [vmem:[%s2 + $0x548] sm:$0xff]
  %v391 = vld [vmem:[%s2 + $0x550] sm:$0xff]
  %v392 = vld [vmem:[%s2 + $0x558] sm:$0xff]
  %v393 = vld [vmem:[%s2 + $0x560] sm:$0xff]
  %v394 = vld [vmem:[%s2 + $0x568] sm:$0xff]
  %v395 = vld [vmem:[%s2 + $0x570] sm:$0xff]
  %v396 = vld [vmem:[%s2 + $0x578] sm:$0xff]
  %v397 = vld [vmem:[%s2 + $0x580] sm:$0xff]
  %v398 = vld [vmem:[%s2 + $0x588] sm:$0xff]
  %v399 = vld [vmem:[%s2 + $0x590] sm:$0xff]
  %v400 = vld [vmem:[%s2 + $0x598] sm:$0xff]
  %v401 = vld [vmem:[%s2 + $0x5a0] sm:$0xff]
  %v402 = vld [vmem:[%s2 + $0x5a8] sm:$0xff]
  %v403 = vld [vmem:[%s2 + $0x5b0] sm:$0xff]
  %v404 = vld [vmem:[%s2 + $0x5b8] sm:$0xff]
  %v405 = vld [vmem:[%s2 + $0x5c0] sm:$0xff]
  %v406 = vld [vmem:[%s2 + $0x5c8] sm:$0xff]
  %v407 = vld [vmem:[%s2 + $0x5d0] sm:$0xff]
  %v408 = vld [vmem:[%s2 + $0x5d8] sm:$0xff]
  %v409 = vld [vmem:[%s2 + $0x5e0] sm:$0xff]
  %v410 = vld [vmem:[%s2 + $0x5e8] sm:$0xff]
  %v411 = vld [vmem:[%s2 + $0x5f0] sm:$0xff]
  %v412 = vld [vmem:[%s2 + $0x5f8] sm:$0xff]
  %v413 = vld [vmem:[%s2 + $0x600] sm:$0xff]
  %v414 = vld [vmem:[%s2 + $0x608] sm:$0xff]
  %v415 = vld [vmem:[%s2 + $0x610] sm:$0xff]
  %v416 = vld [vmem:[%s2 + $0x618] sm:$0xff]
  %v417 = vld [vmem:[%s2 + $0x620] sm:$0xff]
  %v418 = vld [vmem:[%s2 + $0x628] sm:$0xff]
  %v419 = vld [vmem:[%s2 + $0x630] sm:$0xff]
  %v420 = vld [vmem:[%s2 + $0x638] sm:$0xff]
  %v421 = vpack.c.bf16 %v225, %v221
  %v422 = vpack.c.bf16 %v226, %v222
  %v423 = vpack.c.bf16 %v227, %v223
  %v424 = vpack.c.bf16 %v228, %v224
  %v425 = vpack.c.bf16 %v233, %v229
  %v426 = vpack.c.bf16 %v234, %v230
  %v427 = vpack.c.bf16 %v235, %v231
  %v428 = vpack.c.bf16 %v236, %v232
  %v429 = vpack.c.bf16 %v241, %v237
  %v430 = vpack.c.bf16 %v242, %v238
  %v431 = vpack.c.bf16 %v243, %v239
  %v432 = vpack.c.bf16 %v244, %v240
  %v433 = vpack.c.bf16 %v249, %v245
  %v434 = vpack.c.bf16 %v250, %v246
  %v435 = vpack.c.bf16 %v251, %v247
  %v436 = vpack.c.bf16 %v252, %v248
  %v437 = vpack.c.bf16 %v257, %v253
  %v438 = vpack.c.bf16 %v258, %v254
  %v439 = vpack.c.bf16 %v259, %v255
  %v440 = vpack.c.bf16 %v260, %v256
  %v441 = vpack.c.bf16 %v265, %v261
  %v442 = vpack.c.bf16 %v266, %v262
  %v443 = vpack.c.bf16 %v267, %v263
  %v444 = vpack.c.bf16 %v268, %v264
  %v445 = vpack.c.bf16 %v273, %v269
  %v446 = vpack.c.bf16 %v274, %v270
  %v447 = vpack.c.bf16 %v275, %v271
  %v448 = vpack.c.bf16 %v276, %v272
  %v449 = vpack.c.bf16 %v281, %v277
  %v450 = vpack.c.bf16 %v282, %v278
  %v451 = vpack.c.bf16 %v283, %v279
  %v452 = vpack.c.bf16 %v284, %v280
  %v453 = vpack.c.bf16 %v289, %v285
  %v454 = vpack.c.bf16 %v290, %v286
  %v455 = vpack.c.bf16 %v291, %v287
  %v456 = vpack.c.bf16 %v292, %v288
  %v457 = vpack.c.bf16 %v297, %v293
  %v458 = vpack.c.bf16 %v298, %v294
  %v459 = vpack.c.bf16 %v299, %v295
  %v460 = vpack.c.bf16 %v300, %v296
  %v461 = vpack.c.bf16 %v305, %v301
  %v462 = vpack.c.bf16 %v306, %v302
  %v463 = vpack.c.bf16 %v307, %v303
  %v464 = vpack.c.bf16 %v308, %v304
  %v465 = vpack.c.bf16 %v313, %v309
  %v466 = vpack.c.bf16 %v314, %v310
  %v467 = vpack.c.bf16 %v315, %v311
  %v468 = vpack.c.bf16 %v316, %v312
  %v469 = vpack.c.bf16 %v321, %v317
  %v470 = vpack.c.bf16 %v322, %v318
  %v471 = vpack.c.bf16 %v323, %v319
  %v472 = vpack.c.bf16 %v324, %v320
  %v473 = vpack.c.bf16 %v329, %v325
  %v474 = vpack.c.bf16 %v330, %v326
  %v475 = vpack.c.bf16 %v331, %v327
  %v476 = vpack.c.bf16 %v332, %v328
  %v477 = vpack.c.bf16 %v337, %v333
  %v478 = vpack.c.bf16 %v338, %v334
  %v479 = vpack.c.bf16 %v339, %v335
  %v480 = vpack.c.bf16 %v340, %v336
  %v481 = vpack.c.bf16 %v345, %v341
  %v482 = vpack.c.bf16 %v346, %v342
  %v483 = vpack.c.bf16 %v347, %v343
  %v484 = vpack.c.bf16 %v348, %v344
  %v485 = vpack.c.bf16 %v353, %v349
  %v486 = vpack.c.bf16 %v354, %v350
  %v487 = vpack.c.bf16 %v355, %v351
  %v488 = vpack.c.bf16 %v356, %v352
  %v489 = vpack.c.bf16 %v361, %v357
  %v490 = vpack.c.bf16 %v362, %v358
  %v491 = vpack.c.bf16 %v363, %v359
  %v492 = vpack.c.bf16 %v364, %v360
  %v493 = vpack.c.bf16 %v369, %v365
  %v494 = vpack.c.bf16 %v370, %v366
  %v495 = vpack.c.bf16 %v371, %v367
  %v496 = vpack.c.bf16 %v372, %v368
  %v497 = vpack.c.bf16 %v377, %v373
  %v498 = vpack.c.bf16 %v378, %v374
  %v499 = vpack.c.bf16 %v379, %v375
  %v500 = vpack.c.bf16 %v380, %v376
  %v501 = vpack.c.bf16 %v385, %v381
  %v502 = vpack.c.bf16 %v386, %v382
  %v503 = vpack.c.bf16 %v387, %v383
  %v504 = vpack.c.bf16 %v388, %v384
  %v505 = vpack.c.bf16 %v393, %v389
  %v506 = vpack.c.bf16 %v394, %v390
  %v507 = vpack.c.bf16 %v395, %v391
  %v508 = vpack.c.bf16 %v396, %v392
  %v509 = vpack.c.bf16 %v401, %v397
  %v510 = vpack.c.bf16 %v402, %v398
  %v511 = vpack.c.bf16 %v403, %v399
  %v512 = vpack.c.bf16 %v404, %v400
  %v513 = vpack.c.bf16 %v409, %v405
  %v514 = vpack.c.bf16 %v410, %v406
  %v515 = vpack.c.bf16 %v411, %v407
  %v516 = vpack.c.bf16 %v412, %v408
  %v517 = vpack.c.bf16 %v417, %v413
  %v518 = vpack.c.bf16 %v418, %v414
  %v519 = vpack.c.bf16 %v419, %v415
  %v520 = vpack.c.bf16 %v420, %v416
  %v521 = vpack.c.bf16 %v172, %v171
  %v522 = vpack.c.bf16 %v174, %v173
  %v523 = vpack.c.bf16 %v176, %v175
  %v524 = vpack.c.bf16 %v178, %v177
  %v525 = vpack.c.bf16 %v180, %v179
  %v526 = vpack.c.bf16 %v182, %v181
  %v527 = vpack.c.bf16 %v184, %v183
  %v528 = vpack.c.bf16 %v186, %v185
  %v529 = vpack.c.bf16 %v188, %v187
  %v530 = vpack.c.bf16 %v190, %v189
  %v531 = vpack.c.bf16 %v192, %v191
  %v532 = vpack.c.bf16 %v194, %v193
  %v533 = vpack.c.bf16 %v196, %v195
  %v534 = vpack.c.bf16 %v198, %v197
  %v535 = vpack.c.bf16 %v200, %v199
  %v536 = vpack.c.bf16 %v202, %v201
  %v537 = vpack.c.bf16 %v204, %v203
  %v538 = vpack.c.bf16 %v206, %v205
  %v539 = vpack.c.bf16 %v208, %v207
  %v540 = vpack.c.bf16 %v210, %v209
  %v541 = vpack.c.bf16 %v212, %v211
  %v542 = vpack.c.bf16 %v214, %v213
  %v543 = vpack.c.bf16 %v216, %v215
  %v544 = vpack.c.bf16 %v218, %v217
  %v545 = vpack.c.bf16 %v220, %v219
  %vm546 = vcmask 130048
  %v548 = vsel %vm546, %v424, 0
  %v551 = vsel %vm546, %v428, 0
  %v554 = vsel %vm546, %v432, 0
  %v557 = vsel %vm546, %v436, 0
  %v560 = vsel %vm546, %v440, 0
  %v563 = vsel %vm546, %v444, 0
  %v566 = vsel %vm546, %v448, 0
  %v569 = vsel %vm546, %v452, 0
  %v572 = vsel %vm546, %v456, 0
  %v575 = vsel %vm546, %v460, 0
  %v578 = vsel %vm546, %v464, 0
  %v581 = vsel %vm546, %v468, 0
  %v584 = vsel %vm546, %v472, 0
  %v587 = vsel %vm546, %v476, 0
  %v590 = vsel %vm546, %v480, 0
  %v593 = vsel %vm546, %v484, 0
  %v596 = vsel %vm546, %v488, 0
  %v599 = vsel %vm546, %v492, 0
  %v602 = vsel %vm546, %v496, 0
  %v605 = vsel %vm546, %v500, 0
  %v608 = vsel %vm546, %v504, 0
  %v611 = vsel %vm546, %v508, 0
  %v614 = vsel %vm546, %v512, 0
  %v617 = vsel %vm546, %v516, 0
  %v620 = vsel %vm546, %v520, 0
  %622 = vmatpush.bf16.msra.mxu0 %v528
  %623 = vmatpush.bf16.msra.mxu0 %v527
  %624 = vmatpush.bf16.msra.mxu0 %v526
  %625 = vmatpush.bf16.msra.mxu0 %v525
  %626 = vmatpush.bf16.msra.mxu0 %v524
  %627 = vmatpush.bf16.msra.mxu0 %v523
  %628 = vmatpush.bf16.msra.mxu0 %v522
  %629 = vmatpush.bf16.msra.mxu0 %v521
  %630 = vmatmul.bf16.gmra.mxu0 %v421
  %v631 = vpop.f32.mrf.mxu0
  %v632 = vadd.f32 0.0, %v631
  %v633 = vpop.f32.mrf.mxu0
  %v634 = vadd.f32 0.0, %v633
  %635 = vmatmul.bf16.gmra.mxu0 %v425
  %v636 = vpop.f32.mrf.mxu0
  %v637 = vadd.f32 0.0, %v636
  %v638 = vpop.f32.mrf.mxu0
  %v639 = vadd.f32 0.0, %v638
  %640 = vmatmul.bf16.gmra.mxu0 %v429
  %v641 = vpop.f32.mrf.mxu0
  %v642 = vadd.f32 0.0, %v641
  %v643 = vpop.f32.mrf.mxu0
  %v644 = vadd.f32 0.0, %v643
  %645 = vmatmul.bf16.gmra.mxu0 %v433
  %v646 = vpop.f32.mrf.mxu0
  %v647 = vadd.f32 0.0, %v646
  %v648 = vpop.f32.mrf.mxu0
  %v649 = vadd.f32 0.0, %v648
  %650 = vmatmul.bf16.gmra.mxu0 %v437
  %v651 = vpop.f32.mrf.mxu0
  %v652 = vadd.f32 0.0, %v651
  %v653 = vpop.f32.mrf.mxu0
  %v654 = vadd.f32 0.0, %v653
  %655 = vmatmul.bf16.gmra.mxu0 %v441
  %v656 = vpop.f32.mrf.mxu0
  %v657 = vadd.f32 0.0, %v656
  %v658 = vpop.f32.mrf.mxu0
  %v659 = vadd.f32 0.0, %v658
  %660 = vmatmul.bf16.gmra.mxu0 %v445
  %v661 = vpop.f32.mrf.mxu0
  %v662 = vadd.f32 0.0, %v661
  %v663 = vpop.f32.mrf.mxu0
  %v664 = vadd.f32 0.0, %v663
  %665 = vmatmul.bf16.gmra.mxu0 %v449
  %v666 = vpop.f32.mrf.mxu0
  %v667 = vadd.f32 0.0, %v666
  %v668 = vpop.f32.mrf.mxu0
  %v669 = vadd.f32 0.0, %v668
  %670 = vmatmul.bf16.gmra.mxu0 %v453
  %v671 = vpop.f32.mrf.mxu0
  %v672 = vadd.f32 0.0, %v671
  %v673 = vpop.f32.mrf.mxu0
  %v674 = vadd.f32 0.0, %v673
  %675 = vmatmul.bf16.gmra.mxu0 %v457
  %v676 = vpop.f32.mrf.mxu0
  %v677 = vadd.f32 0.0, %v676
  %v678 = vpop.f32.mrf.mxu0
  %v679 = vadd.f32 0.0, %v678
  %680 = vmatmul.bf16.gmra.mxu0 %v461
  %v681 = vpop.f32.mrf.mxu0
  %v682 = vadd.f32 0.0, %v681
  %v683 = vpop.f32.mrf.mxu0
  %v684 = vadd.f32 0.0, %v683
  %685 = vmatmul.bf16.gmra.mxu0 %v465
  %v686 = vpop.f32.mrf.mxu0
  %v687 = vadd.f32 0.0, %v686
  %v688 = vpop.f32.mrf.mxu0
  %v689 = vadd.f32 0.0, %v688
  %690 = vmatmul.bf16.gmra.mxu0 %v469
  %v691 = vpop.f32.mrf.mxu0
  %v692 = vadd.f32 0.0, %v691
  %v693 = vpop.f32.mrf.mxu0
  %v694 = vadd.f32 0.0, %v693
  %695 = vmatmul.bf16.gmra.mxu0 %v473
  %v696 = vpop.f32.mrf.mxu0
  %v697 = vadd.f32 0.0, %v696
  %v698 = vpop.f32.mrf.mxu0
  %v699 = vadd.f32 0.0, %v698
  %700 = vmatmul.bf16.gmra.mxu0 %v477
  %v701 = vpop.f32.mrf.mxu0
  %v702 = vadd.f32 0.0, %v701
  %v703 = vpop.f32.mrf.mxu0
  %v704 = vadd.f32 0.0, %v703
  %705 = vmatmul.bf16.gmra.mxu0 %v481
  %v706 = vpop.f32.mrf.mxu0
  %v707 = vadd.f32 0.0, %v706
  %v708 = vpop.f32.mrf.mxu0
  %v709 = vadd.f32 0.0, %v708
  %710 = vmatmul.bf16.gmra.mxu0 %v485
  %v711 = vpop.f32.mrf.mxu0
  %v712 = vadd.f32 0.0, %v711
  %v713 = vpop.f32.mrf.mxu0
  %v714 = vadd.f32 0.0, %v713
  %715 = vmatmul.bf16.gmra.mxu0 %v489
  %v716 = vpop.f32.mrf.mxu0
  %v717 = vadd.f32 0.0, %v716
  %v718 = vpop.f32.mrf.mxu0
  %v719 = vadd.f32 0.0, %v718
  %720 = vmatmul.bf16.gmra.mxu0 %v493
  %v721 = vpop.f32.mrf.mxu0
  %v722 = vadd.f32 0.0, %v721
  %v723 = vpop.f32.mrf.mxu0
  %v724 = vadd.f32 0.0, %v723
  %725 = vmatmul.bf16.gmra.mxu0 %v497
  %v726 = vpop.f32.mrf.mxu0
  %v727 = vadd.f32 0.0, %v726
  %v728 = vpop.f32.mrf.mxu0
  %v729 = vadd.f32 0.0, %v728
  %730 = vmatmul.bf16.gmra.mxu0 %v501
  %v731 = vpop.f32.mrf.mxu0
  %v732 = vadd.f32 0.0, %v731
  %v733 = vpop.f32.mrf.mxu0
  %v734 = vadd.f32 0.0, %v733
  %735 = vmatmul.bf16.gmra.mxu0 %v505
  %v736 = vpop.f32.mrf.mxu0
  %v737 = vadd.f32 0.0, %v736
  %v738 = vpop.f32.mrf.mxu0
  %v739 = vadd.f32 0.0, %v738
  %740 = vmatmul.bf16.gmra.mxu0 %v509
  %v741 = vpop.f32.mrf.mxu0
  %v742 = vadd.f32 0.0, %v741
  %v743 = vpop.f32.mrf.mxu0
  %v744 = vadd.f32 0.0, %v743
  %745 = vmatmul.bf16.gmra.mxu0 %v513
  %v746 = vpop.f32.mrf.mxu0
  %v747 = vadd.f32 0.0, %v746
  %v748 = vpop.f32.mrf.mxu0
  %v749 = vadd.f32 0.0, %v748
  %750 = vmatmul.bf16.gmra.mxu0 %v517
  %v751 = vpop.f32.mrf.mxu0
  %v752 = vadd.f32 0.0, %v751
  %v753 = vpop.f32.mrf.mxu0
  %v754 = vadd.f32 0.0, %v753
  %755 = vdwg.mxu0
  %756 = vmatpush.bf16.msra.mxu0 %v536
  %757 = vmatpush.bf16.msra.mxu0 %v535
  %758 = vmatpush.bf16.msra.mxu0 %v534
  %759 = vmatpush.bf16.msra.mxu0 %v533
  %760 = vmatpush.bf16.msra.mxu0 %v532
  %761 = vmatpush.bf16.msra.mxu0 %v531
  %762 = vmatpush.bf16.msra.mxu0 %v530
  %763 = vmatpush.bf16.msra.mxu0 %v529
  %764 = vmatmul.bf16.gmra.mxu0 %v422
  %v765 = vpop.f32.mrf.mxu0
  %v766 = vadd.f32 %v632, %v765
  %v767 = vpop.f32.mrf.mxu0
  %v768 = vadd.f32 %v634, %v767
  %769 = vmatmul.bf16.gmra.mxu0 %v426
  %v770 = vpop.f32.mrf.mxu0
  %v771 = vadd.f32 %v637, %v770
  %v772 = vpop.f32.mrf.mxu0
  %v773 = vadd.f32 %v639, %v772
  %774 = vmatmul.bf16.gmra.mxu0 %v430
  %v775 = vpop.f32.mrf.mxu0
  %v776 = vadd.f32 %v642, %v775
  %v777 = vpop.f32.mrf.mxu0
  %v778 = vadd.f32 %v644, %v777
  %779 = vmatmul.bf16.gmra.mxu0 %v434
  %v780 = vpop.f32.mrf.mxu0
  %v781 = vadd.f32 %v647, %v780
  %v782 = vpop.f32.mrf.mxu0
  %v783 = vadd.f32 %v649, %v782
  %784 = vmatmul.bf16.gmra.mxu0 %v438
  %v785 = vpop.f32.mrf.mxu0
  %v786 = vadd.f32 %v652, %v785
  %v787 = vpop.f32.mrf.mxu0
  %v788 = vadd.f32 %v654, %v787
  %789 = vmatmul.bf16.gmra.mxu0 %v442
  %v790 = vpop.f32.mrf.mxu0
  %v791 = vadd.f32 %v657, %v790
  %v792 = vpop.f32.mrf.mxu0
  %v793 = vadd.f32 %v659, %v792
  %794 = vmatmul.bf16.gmra.mxu0 %v446
  %v795 = vpop.f32.mrf.mxu0
  %v796 = vadd.f32 %v662, %v795
  %v797 = vpop.f32.mrf.mxu0
  %v798 = vadd.f32 %v664, %v797
  %799 = vmatmul.bf16.gmra.mxu0 %v450
  %v800 = vpop.f32.mrf.mxu0
  %v801 = vadd.f32 %v667, %v800
  %v802 = vpop.f32.mrf.mxu0
  %v803 = vadd.f32 %v669, %v802
  %804 = vmatmul.bf16.gmra.mxu0 %v454
  %v805 = vpop.f32.mrf.mxu0
  %v806 = vadd.f32 %v672, %v805
  %v807 = vpop.f32.mrf.mxu0
  %v808 = vadd.f32 %v674, %v807
  %809 = vmatmul.bf16.gmra.mxu0 %v458
  %v810 = vpop.f32.mrf.mxu0
  %v811 = vadd.f32 %v677, %v810
  %v812 = vpop.f32.mrf.mxu0
  %v813 = vadd.f32 %v679, %v812
  %814 = vmatmul.bf16.gmra.mxu0 %v462
  %v815 = vpop.f32.mrf.mxu0
  %v816 = vadd.f32 %v682, %v815
  %v817 = vpop.f32.mrf.mxu0
  %v818 = vadd.f32 %v684, %v817
  %819 = vmatmul.bf16.gmra.mxu0 %v466
  %v820 = vpop.f32.mrf.mxu0
  %v821 = vadd.f32 %v687, %v820
  %v822 = vpop.f32.mrf.mxu0
  %v823 = vadd.f32 %v689, %v822
  %824 = vmatmul.bf16.gmra.mxu0 %v470
  %v825 = vpop.f32.mrf.mxu0
  %v826 = vadd.f32 %v692, %v825
  %v827 = vpop.f32.mrf.mxu0
  %v828 = vadd.f32 %v694, %v827
  %829 = vmatmul.bf16.gmra.mxu0 %v474
  %v830 = vpop.f32.mrf.mxu0
  %v831 = vadd.f32 %v697, %v830
  %v832 = vpop.f32.mrf.mxu0
  %v833 = vadd.f32 %v699, %v832
  %834 = vmatmul.bf16.gmra.mxu0 %v478
  %v835 = vpop.f32.mrf.mxu0
  %v836 = vadd.f32 %v702, %v835
  %v837 = vpop.f32.mrf.mxu0
  %v838 = vadd.f32 %v704, %v837
  %839 = vmatmul.bf16.gmra.mxu0 %v482
  %v840 = vpop.f32.mrf.mxu0
  %v841 = vadd.f32 %v707, %v840
  %v842 = vpop.f32.mrf.mxu0
  %v843 = vadd.f32 %v709, %v842
  %844 = vmatmul.bf16.gmra.mxu0 %v486
  %v845 = vpop.f32.mrf.mxu0
  %v846 = vadd.f32 %v712, %v845
  %v847 = vpop.f32.mrf.mxu0
  %v848 = vadd.f32 %v714, %v847
  %849 = vmatmul.bf16.gmra.mxu0 %v490
  %v850 = vpop.f32.mrf.mxu0
  %v851 = vadd.f32 %v717, %v850
  %v852 = vpop.f32.mrf.mxu0
  %v853 = vadd.f32 %v719, %v852
  %854 = vmatmul.bf16.gmra.mxu0 %v494
  %v855 = vpop.f32.mrf.mxu0
  %v856 = vadd.f32 %v722, %v855
  %v857 = vpop.f32.mrf.mxu0
  %v858 = vadd.f32 %v724, %v857
  %859 = vmatmul.bf16.gmra.mxu0 %v498
  %v860 = vpop.f32.mrf.mxu0
  %v861 = vadd.f32 %v727, %v860
  %v862 = vpop.f32.mrf.mxu0
  %v863 = vadd.f32 %v729, %v862
  %864 = vmatmul.bf16.gmra.mxu0 %v502
  %v865 = vpop.f32.mrf.mxu0
  %v866 = vadd.f32 %v732, %v865
  %v867 = vpop.f32.mrf.mxu0
  %v868 = vadd.f32 %v734, %v867
  %869 = vmatmul.bf16.gmra.mxu0 %v506
  %v870 = vpop.f32.mrf.mxu0
  %v871 = vadd.f32 %v737, %v870
  %v872 = vpop.f32.mrf.mxu0
  %v873 = vadd.f32 %v739, %v872
  %874 = vmatmul.bf16.gmra.mxu0 %v510
  %v875 = vpop.f32.mrf.mxu0
  %v876 = vadd.f32 %v742, %v875
  %v877 = vpop.f32.mrf.mxu0
  %v878 = vadd.f32 %v744, %v877
  %879 = vmatmul.bf16.gmra.mxu0 %v514
  %v880 = vpop.f32.mrf.mxu0
  %v881 = vadd.f32 %v747, %v880
  %v882 = vpop.f32.mrf.mxu0
  %v883 = vadd.f32 %v749, %v882
  %884 = vmatmul.bf16.gmra.mxu0 %v518
  %v885 = vpop.f32.mrf.mxu0
  %v886 = vadd.f32 %v752, %v885
  %v887 = vpop.f32.mrf.mxu0
  %v888 = vadd.f32 %v754, %v887
  %889 = vdwg.mxu0
  %890 = vmatpush.bf16.msra.mxu0 %v544
  %891 = vmatpush.bf16.msra.mxu0 %v543
  %892 = vmatpush.bf16.msra.mxu0 %v542
  %893 = vmatpush.bf16.msra.mxu0 %v541
  %894 = vmatpush.bf16.msra.mxu0 %v540
  %895 = vmatpush.bf16.msra.mxu0 %v539
  %896 = vmatpush.bf16.msra.mxu0 %v538
  %897 = vmatpush.bf16.msra.mxu0 %v537
  %898 = vmatmul.bf16.gmra.mxu0 %v423
  %v899 = vpop.f32.mrf.mxu0
  %v900 = vadd.f32 %v766, %v899
  %v901 = vpop.f32.mrf.mxu0
  %v902 = vadd.f32 %v768, %v901
  %903 = vmatmul.bf16.gmra.mxu0 %v427
  %v904 = vpop.f32.mrf.mxu0
  %v905 = vadd.f32 %v771, %v904
  %v906 = vpop.f32.mrf.mxu0
  %v907 = vadd.f32 %v773, %v906
  %908 = vmatmul.bf16.gmra.mxu0 %v431
  %v909 = vpop.f32.mrf.mxu0
  %v910 = vadd.f32 %v776, %v909
  %v911 = vpop.f32.mrf.mxu0
  %v912 = vadd.f32 %v778, %v911
  %913 = vmatmul.bf16.gmra.mxu0 %v435
  %v914 = vpop.f32.mrf.mxu0
  %v915 = vadd.f32 %v781, %v914
  %v916 = vpop.f32.mrf.mxu0
  %v917 = vadd.f32 %v783, %v916
  %918 = vmatmul.bf16.gmra.mxu0 %v439
  %v919 = vpop.f32.mrf.mxu0
  %v920 = vadd.f32 %v786, %v919
  %v921 = vpop.f32.mrf.mxu0
  %v922 = vadd.f32 %v788, %v921
  %923 = vmatmul.bf16.gmra.mxu0 %v443
  %v924 = vpop.f32.mrf.mxu0
  %v925 = vadd.f32 %v791, %v924
  %v926 = vpop.f32.mrf.mxu0
  %v927 = vadd.f32 %v793, %v926
  %928 = vmatmul.bf16.gmra.mxu0 %v447
  %v929 = vpop.f32.mrf.mxu0
  %v930 = vadd.f32 %v796, %v929
  %v931 = vpop.f32.mrf.mxu0
  %v932 = vadd.f32 %v798, %v931
  %933 = vmatmul.bf16.gmra.mxu0 %v451
  %v934 = vpop.f32.mrf.mxu0
  %v935 = vadd.f32 %v801, %v934
  %v936 = vpop.f32.mrf.mxu0
  %v937 = vadd.f32 %v803, %v936
  %938 = vmatmul.bf16.gmra.mxu0 %v455
  %v939 = vpop.f32.mrf.mxu0
  %v940 = vadd.f32 %v806, %v939
  %v941 = vpop.f32.mrf.mxu0
  %v942 = vadd.f32 %v808, %v941
  %943 = vmatmul.bf16.gmra.mxu0 %v459
  %v944 = vpop.f32.mrf.mxu0
  %v945 = vadd.f32 %v811, %v944
  %v946 = vpop.f32.mrf.mxu0
  %v947 = vadd.f32 %v813, %v946
  %948 = vmatmul.bf16.gmra.mxu0 %v463
  %v949 = vpop.f32.mrf.mxu0
  %v950 = vadd.f32 %v816, %v949
  %v951 = vpop.f32.mrf.mxu0
  %v952 = vadd.f32 %v818, %v951
  %953 = vmatmul.bf16.gmra.mxu0 %v467
  %v954 = vpop.f32.mrf.mxu0
  %v955 = vadd.f32 %v821, %v954
  %v956 = vpop.f32.mrf.mxu0
  %v957 = vadd.f32 %v823, %v956
  %958 = vmatmul.bf16.gmra.mxu0 %v471
  %v959 = vpop.f32.mrf.mxu0
  %v960 = vadd.f32 %v826, %v959
  %v961 = vpop.f32.mrf.mxu0
  %v962 = vadd.f32 %v828, %v961
  %963 = vmatmul.bf16.gmra.mxu0 %v475
  %v964 = vpop.f32.mrf.mxu0
  %v965 = vadd.f32 %v831, %v964
  %v966 = vpop.f32.mrf.mxu0
  %v967 = vadd.f32 %v833, %v966
  %968 = vmatmul.bf16.gmra.mxu0 %v479
  %v969 = vpop.f32.mrf.mxu0
  %v970 = vadd.f32 %v836, %v969
  %v971 = vpop.f32.mrf.mxu0
  %v972 = vadd.f32 %v838, %v971
  %973 = vmatmul.bf16.gmra.mxu0 %v483
  %v974 = vpop.f32.mrf.mxu0
  %v975 = vadd.f32 %v841, %v974
  %v976 = vpop.f32.mrf.mxu0
  %v977 = vadd.f32 %v843, %v976
  %978 = vmatmul.bf16.gmra.mxu0 %v487
  %v979 = vpop.f32.mrf.mxu0
  %v980 = vadd.f32 %v846, %v979
  %v981 = vpop.f32.mrf.mxu0
  %v982 = vadd.f32 %v848, %v981
  %983 = vmatmul.bf16.gmra.mxu0 %v491
  %v984 = vpop.f32.mrf.mxu0
  %v985 = vadd.f32 %v851, %v984
  %v986 = vpop.f32.mrf.mxu0
  %v987 = vadd.f32 %v853, %v986
  %988 = vmatmul.bf16.gmra.mxu0 %v495
  %v989 = vpop.f32.mrf.mxu0
  %v990 = vadd.f32 %v856, %v989
  %v991 = vpop.f32.mrf.mxu0
  %v992 = vadd.f32 %v858, %v991
  %993 = vmatmul.bf16.gmra.mxu0 %v499
  %v994 = vpop.f32.mrf.mxu0
  %v995 = vadd.f32 %v861, %v994
  %v996 = vpop.f32.mrf.mxu0
  %v997 = vadd.f32 %v863, %v996
  %998 = vmatmul.bf16.gmra.mxu0 %v503
  %v999 = vpop.f32.mrf.mxu0
  %v1000 = vadd.f32 %v866, %v999
  %v1001 = vpop.f32.mrf.mxu0
  %v1002 = vadd.f32 %v868, %v1001
  %1003 = vmatmul.bf16.gmra.mxu0 %v507
  %v1004 = vpop.f32.mrf.mxu0
  %v1005 = vadd.f32 %v871, %v1004
  %v1006 = vpop.f32.mrf.mxu0
  %v1007 = vadd.f32 %v873, %v1006
  %1008 = vmatmul.bf16.gmra.mxu0 %v511
  %v1009 = vpop.f32.mrf.mxu0
  %v1010 = vadd.f32 %v876, %v1009
  %v1011 = vpop.f32.mrf.mxu0
  %v1012 = vadd.f32 %v878, %v1011
  %1013 = vmatmul.bf16.gmra.mxu0 %v515
  %v1014 = vpop.f32.mrf.mxu0
  %v1015 = vadd.f32 %v881, %v1014
  %v1016 = vpop.f32.mrf.mxu0
  %v1017 = vadd.f32 %v883, %v1016
  %1018 = vmatmul.bf16.gmra.mxu0 %v519
  %v1019 = vpop.f32.mrf.mxu0
  %v1020 = vadd.f32 %v886, %v1019
  %v1021 = vpop.f32.mrf.mxu0
  %v1022 = vadd.f32 %v888, %v1021
  %1023 = vdwg.mxu0
  %1024 = vmatpush.bf16.msra.mxu0 0
  %1025 = vmatpush.bf16.msra.mxu0 0
  %1026 = vmatpush.bf16.msra.mxu0 0
  %1027 = vmatpush.bf16.msra.mxu0 0
  %1028 = vmatpush.bf16.msra.mxu0 0
  %1029 = vmatpush.bf16.msra.mxu0 0
  %1030 = vmatpush.bf16.msra.mxu0 0
  %1031 = vmatpush.bf16.msra.mxu0 %v545
  %1032 = vmatmul.bf16.gmra.mxu0 %v548
  %v1033 = vpop.f32.mrf.mxu0
  %v1034 = vadd.f32 %v900, %v1033
  %v1035 = vpop.f32.mrf.mxu0
  %v1036 = vadd.f32 %v902, %v1035
  %1037 = vmatmul.bf16.gmra.mxu0 %v551
  %v1038 = vpop.f32.mrf.mxu0
  %v1039 = vadd.f32 %v905, %v1038
  %v1040 = vpop.f32.mrf.mxu0
  %v1041 = vadd.f32 %v907, %v1040
  %1042 = vmatmul.bf16.gmra.mxu0 %v554
  %v1043 = vpop.f32.mrf.mxu0
  %v1044 = vadd.f32 %v910, %v1043
  %v1045 = vpop.f32.mrf.mxu0
  %v1046 = vadd.f32 %v912, %v1045
  %1047 = vmatmul.bf16.gmra.mxu0 %v557
  %v1048 = vpop.f32.mrf.mxu0
  %v1049 = vadd.f32 %v915, %v1048
  %v1050 = vpop.f32.mrf.mxu0
  %v1051 = vadd.f32 %v917, %v1050
  %1052 = vmatmul.bf16.gmra.mxu0 %v560
  %v1053 = vpop.f32.mrf.mxu0
  %v1054 = vadd.f32 %v920, %v1053
  %v1055 = vpop.f32.mrf.mxu0
  %v1056 = vadd.f32 %v922, %v1055
  %1057 = vmatmul.bf16.gmra.mxu0 %v563
  %v1058 = vpop.f32.mrf.mxu0
  %v1059 = vadd.f32 %v925, %v1058
  %v1060 = vpop.f32.mrf.mxu0
  %v1061 = vadd.f32 %v927, %v1060
  %1062 = vmatmul.bf16.gmra.mxu0 %v566
  %v1063 = vpop.f32.mrf.mxu0
  %v1064 = vadd.f32 %v930, %v1063
  %v1065 = vpop.f32.mrf.mxu0
  %v1066 = vadd.f32 %v932, %v1065
  %1067 = vmatmul.bf16.gmra.mxu0 %v569
  %v1068 = vpop.f32.mrf.mxu0
  %v1069 = vadd.f32 %v935, %v1068
  %v1070 = vpop.f32.mrf.mxu0
  %v1071 = vadd.f32 %v937, %v1070
  %1072 = vmatmul.bf16.gmra.mxu0 %v572
  %v1073 = vpop.f32.mrf.mxu0
  %v1074 = vadd.f32 %v940, %v1073
  %v1075 = vpop.f32.mrf.mxu0
  %v1076 = vadd.f32 %v942, %v1075
  %1077 = vmatmul.bf16.gmra.mxu0 %v575
  %v1078 = vpop.f32.mrf.mxu0
  %v1079 = vadd.f32 %v945, %v1078
  %v1080 = vpop.f32.mrf.mxu0
  %v1081 = vadd.f32 %v947, %v1080
  %1082 = vmatmul.bf16.gmra.mxu0 %v578
  %v1083 = vpop.f32.mrf.mxu0
  %v1084 = vadd.f32 %v950, %v1083
  %v1085 = vpop.f32.mrf.mxu0
  %v1086 = vadd.f32 %v952, %v1085
  %1087 = vmatmul.bf16.gmra.mxu0 %v581
  %v1088 = vpop.f32.mrf.mxu0
  %v1089 = vadd.f32 %v955, %v1088
  %v1090 = vpop.f32.mrf.mxu0
  %v1091 = vadd.f32 %v957, %v1090
  %1092 = vmatmul.bf16.gmra.mxu0 %v584
  %v1093 = vpop.f32.mrf.mxu0
  %v1094 = vadd.f32 %v960, %v1093
  %v1095 = vpop.f32.mrf.mxu0
  %v1096 = vadd.f32 %v962, %v1095
  %1097 = vmatmul.bf16.gmra.mxu0 %v587
  %v1098 = vpop.f32.mrf.mxu0
  %v1099 = vadd.f32 %v965, %v1098
  %v1100 = vpop.f32.mrf.mxu0
  %v1101 = vadd.f32 %v967, %v1100
  %1102 = vmatmul.bf16.gmra.mxu0 %v590
  %v1103 = vpop.f32.mrf.mxu0
  %v1104 = vadd.f32 %v970, %v1103
  %v1105 = vpop.f32.mrf.mxu0
  %v1106 = vadd.f32 %v972, %v1105
  %1107 = vmatmul.bf16.gmra.mxu0 %v593
  %v1108 = vpop.f32.mrf.mxu0
  %v1109 = vadd.f32 %v975, %v1108
  %v1110 = vpop.f32.mrf.mxu0
  %v1111 = vadd.f32 %v977, %v1110
  %1112 = vmatmul.bf16.gmra.mxu0 %v596
  %v1113 = vpop.f32.mrf.mxu0
  %v1114 = vadd.f32 %v980, %v1113
  %v1115 = vpop.f32.mrf.mxu0
  %v1116 = vadd.f32 %v982, %v1115
  %1117 = vmatmul.bf16.gmra.mxu0 %v599
  %v1118 = vpop.f32.mrf.mxu0
  %v1119 = vadd.f32 %v985, %v1118
  %v1120 = vpop.f32.mrf.mxu0
  %v1121 = vadd.f32 %v987, %v1120
  %1122 = vmatmul.bf16.gmra.mxu0 %v602
  %v1123 = vpop.f32.mrf.mxu0
  %v1124 = vadd.f32 %v990, %v1123
  %v1125 = vpop.f32.mrf.mxu0
  %v1126 = vadd.f32 %v992, %v1125
  %1127 = vmatmul.bf16.gmra.mxu0 %v605
  %v1128 = vpop.f32.mrf.mxu0
  %v1129 = vadd.f32 %v995, %v1128
  %v1130 = vpop.f32.mrf.mxu0
  %v1131 = vadd.f32 %v997, %v1130
  %1132 = vmatmul.bf16.gmra.mxu0 %v608
  %v1133 = vpop.f32.mrf.mxu0
  %v1134 = vadd.f32 %v1000, %v1133
  %v1135 = vpop.f32.mrf.mxu0
  %v1136 = vadd.f32 %v1002, %v1135
  %1137 = vmatmul.bf16.gmra.mxu0 %v611
  %v1138 = vpop.f32.mrf.mxu0
  %v1139 = vadd.f32 %v1005, %v1138
  %v1140 = vpop.f32.mrf.mxu0
  %v1141 = vadd.f32 %v1007, %v1140
  %1142 = vmatmul.bf16.gmra.mxu0 %v614
  %v1143 = vpop.f32.mrf.mxu0
  %v1144 = vadd.f32 %v1010, %v1143
  %v1145 = vpop.f32.mrf.mxu0
  %v1146 = vadd.f32 %v1012, %v1145
  %1147 = vmatmul.bf16.gmra.mxu0 %v617
  %v1148 = vpop.f32.mrf.mxu0
  %v1149 = vadd.f32 %v1015, %v1148
  %v1150 = vpop.f32.mrf.mxu0
  %v1151 = vadd.f32 %v1017, %v1150
  %1152 = vmatmul.bf16.gmra.mxu0 %v620
  %v1153 = vpop.f32.mrf.mxu0
  %v1154 = vadd.f32 %v1020, %v1153
  %v1155 = vpop.f32.mrf.mxu0
  %v1156 = vadd.f32 %v1022, %v1155
  %1157 = vdwg.mxu0
  %vm1158 = vcmask 400384
  %v1159 = vsel %vm1158, %v1034, 0.0
  %1160 = vadd.xlane.f32.xlu0 %v1159
  %v1161 = vpop.xlane.xlu0 %1160
  %v1162 = vsel %vm1158, %v1036, 0.0
  %1163 = vadd.xlane.f32.xlu0 %v1162
  %v1164 = vpop.xlane.xlu0 %1163
  %v1165 = vsel %vm1158, %v1039, 0.0
  %1166 = vadd.xlane.f32.xlu0 %v1165
  %v1167 = vpop.xlane.xlu0 %1166
  %v1168 = vsel %vm1158, %v1041, 0.0
  %1169 = vadd.xlane.f32.xlu0 %v1168
  %v1170 = vpop.xlane.xlu0 %1169
  %v1171 = vsel %vm1158, %v1044, 0.0
  %1172 = vadd.xlane.f32.xlu0 %v1171
  %v1173 = vpop.xlane.xlu0 %1172
  %v1174 = vsel %vm1158, %v1046, 0.0
  %1175 = vadd.xlane.f32.xlu0 %v1174
  %v1176 = vpop.xlane.xlu0 %1175
  %v1177 = vsel %vm1158, %v1049, 0.0
  %1178 = vadd.xlane.f32.xlu0 %v1177
  %v1179 = vpop.xlane.xlu0 %1178
  %v1180 = vsel %vm1158, %v1051, 0.0
  %1181 = vadd.xlane.f32.xlu0 %v1180
  %v1182 = vpop.xlane.xlu0 %1181
  %v1183 = vsel %vm1158, %v1054, 0.0
  %1184 = vadd.xlane.f32.xlu0 %v1183
  %v1185 = vpop.xlane.xlu0 %1184
  %v1186 = vsel %vm1158, %v1056, 0.0
  %1187 = vadd.xlane.f32.xlu0 %v1186
  %v1188 = vpop.xlane.xlu0 %1187
  %v1189 = vsel %vm1158, %v1059, 0.0
  %1190 = vadd.xlane.f32.xlu0 %v1189
  %v1191 = vpop.xlane.xlu0 %1190
  %v1192 = vsel %vm1158, %v1061, 0.0
  %1193 = vadd.xlane.f32.xlu0 %v1192
  %v1194 = vpop.xlane.xlu0 %1193
  %v1195 = vsel %vm1158, %v1064, 0.0
  %1196 = vadd.xlane.f32.xlu0 %v1195
  %v1197 = vpop.xlane.xlu0 %1196
  %v1198 = vsel %vm1158, %v1066, 0.0
  %1199 = vadd.xlane.f32.xlu0 %v1198
  %v1200 = vpop.xlane.xlu0 %1199
  %v1201 = vsel %vm1158, %v1069, 0.0
  %1202 = vadd.xlane.f32.xlu0 %v1201
  %v1203 = vpop.xlane.xlu0 %1202
  %v1204 = vsel %vm1158, %v1071, 0.0
  %1205 = vadd.xlane.f32.xlu0 %v1204
  %v1206 = vpop.xlane.xlu0 %1205
  %v1207 = vsel %vm1158, %v1074, 0.0
  %1208 = vadd.xlane.f32.xlu0 %v1207
  %v1209 = vpop.xlane.xlu0 %1208
  %v1210 = vsel %vm1158, %v1076, 0.0
  %1211 = vadd.xlane.f32.xlu0 %v1210
  %v1212 = vpop.xlane.xlu0 %1211
  %v1213 = vsel %vm1158, %v1079, 0.0
  %1214 = vadd.xlane.f32.xlu0 %v1213
  %v1215 = vpop.xlane.xlu0 %1214
  %v1216 = vsel %vm1158, %v1081, 0.0
  %1217 = vadd.xlane.f32.xlu0 %v1216
  %v1218 = vpop.xlane.xlu0 %1217
  %v1219 = vsel %vm1158, %v1084, 0.0
  %1220 = vadd.xlane.f32.xlu0 %v1219
  %v1221 = vpop.xlane.xlu0 %1220
  %v1222 = vsel %vm1158, %v1086, 0.0
  %1223 = vadd.xlane.f32.xlu0 %v1222
  %v1224 = vpop.xlane.xlu0 %1223
  %v1225 = vsel %vm1158, %v1089, 0.0
  %1226 = vadd.xlane.f32.xlu0 %v1225
  %v1227 = vpop.xlane.xlu0 %1226
  %v1228 = vsel %vm1158, %v1091, 0.0
  %1229 = vadd.xlane.f32.xlu0 %v1228
  %v1230 = vpop.xlane.xlu0 %1229
  %v1231 = vsel %vm1158, %v1094, 0.0
  %1232 = vadd.xlane.f32.xlu0 %v1231
  %v1233 = vpop.xlane.xlu0 %1232
  %v1234 = vsel %vm1158, %v1096, 0.0
  %1235 = vadd.xlane.f32.xlu0 %v1234
  %v1236 = vpop.xlane.xlu0 %1235
  %v1237 = vsel %vm1158, %v1099, 0.0
  %1238 = vadd.xlane.f32.xlu0 %v1237
  %v1239 = vpop.xlane.xlu0 %1238
  %v1240 = vsel %vm1158, %v1101, 0.0
  %1241 = vadd.xlane.f32.xlu0 %v1240
  %v1242 = vpop.xlane.xlu0 %1241
  %v1243 = vsel %vm1158, %v1104, 0.0
  %1244 = vadd.xlane.f32.xlu0 %v1243
  %v1245 = vpop.xlane.xlu0 %1244
  %v1246 = vsel %vm1158, %v1106, 0.0
  %1247 = vadd.xlane.f32.xlu0 %v1246
  %v1248 = vpop.xlane.xlu0 %1247
  %v1249 = vsel %vm1158, %v1109, 0.0
  %1250 = vadd.xlane.f32.xlu0 %v1249
  %v1251 = vpop.xlane.xlu0 %1250
  %v1252 = vsel %vm1158, %v1111, 0.0
  %1253 = vadd.xlane.f32.xlu0 %v1252
  %v1254 = vpop.xlane.xlu0 %1253
  %v1255 = vsel %vm1158, %v1114, 0.0
  %1256 = vadd.xlane.f32.xlu0 %v1255
  %v1257 = vpop.xlane.xlu0 %1256
  %v1258 = vsel %vm1158, %v1116, 0.0
  %1259 = vadd.xlane.f32.xlu0 %v1258
  %v1260 = vpop.xlane.xlu0 %1259
  %v1261 = vsel %vm1158, %v1119, 0.0
  %1262 = vadd.xlane.f32.xlu0 %v1261
  %v1263 = vpop.xlane.xlu0 %1262
  %v1264 = vsel %vm1158, %v1121, 0.0
  %1265 = vadd.xlane.f32.xlu0 %v1264
  %v1266 = vpop.xlane.xlu0 %1265
  %v1267 = vsel %vm1158, %v1124, 0.0
  %1268 = vadd.xlane.f32.xlu0 %v1267
  %v1269 = vpop.xlane.xlu0 %1268
  %v1270 = vsel %vm1158, %v1126, 0.0
  %1271 = vadd.xlane.f32.xlu0 %v1270
  %v1272 = vpop.xlane.xlu0 %1271
  %v1273 = vsel %vm1158, %v1129, 0.0
  %1274 = vadd.xlane.f32.xlu0 %v1273
  %v1275 = vpop.xlane.xlu0 %1274
  %v1276 = vsel %vm1158, %v1131, 0.0
  %1277 = vadd.xlane.f32.xlu0 %v1276
  %v1278 = vpop.xlane.xlu0 %1277
  %v1279 = vsel %vm1158, %v1134, 0.0
  %1280 = vadd.xlane.f32.xlu0 %v1279
  %v1281 = vpop.xlane.xlu0 %1280
  %v1282 = vsel %vm1158, %v1136, 0.0
  %1283 = vadd.xlane.f32.xlu0 %v1282
  %v1284 = vpop.xlane.xlu0 %1283
  %v1285 = vsel %vm1158, %v1139, 0.0
  %1286 = vadd.xlane.f32.xlu0 %v1285
  %v1287 = vpop.xlane.xlu0 %1286
  %v1288 = vsel %vm1158, %v1141, 0.0
  %1289 = vadd.xlane.f32.xlu0 %v1288
  %v1290 = vpop.xlane.xlu0 %1289
  %v1291 = vsel %vm1158, %v1144, 0.0
  %1292 = vadd.xlane.f32.xlu0 %v1291
  %v1293 = vpop.xlane.xlu0 %1292
  %v1294 = vsel %vm1158, %v1146, 0.0
  %1295 = vadd.xlane.f32.xlu0 %v1294
  %v1296 = vpop.xlane.xlu0 %1295
  %v1297 = vsel %vm1158, %v1149, 0.0
  %1298 = vadd.xlane.f32.xlu0 %v1297
  %v1299 = vpop.xlane.xlu0 %1298
  %v1300 = vsel %vm1158, %v1151, 0.0
  %1301 = vadd.xlane.f32.xlu0 %v1300
  %v1302 = vpop.xlane.xlu0 %1301
  %v1303 = vsel %vm1158, %v1154, 0.0
  %1304 = vadd.xlane.f32.xlu0 %v1303
  %v1305 = vpop.xlane.xlu0 %1304
  %v1306 = vsel %vm1158, %v1156, 0.0
  %1307 = vadd.xlane.f32.xlu0 %v1306
  %v1308 = vpop.xlane.xlu0 %1307
  %v1309 = vmul.f32 %v1161, 0.020408163
  %v1310 = vmul.f32 %v1164, 0.020408163
  %v1311 = vmul.f32 %v1167, 0.020408163
  %v1312 = vmul.f32 %v1170, 0.020408163
  %v1313 = vmul.f32 %v1173, 0.020408163
  %v1314 = vmul.f32 %v1176, 0.020408163
  %v1315 = vmul.f32 %v1179, 0.020408163
  %v1316 = vmul.f32 %v1182, 0.020408163
  %v1317 = vmul.f32 %v1185, 0.020408163
  %v1318 = vmul.f32 %v1188, 0.020408163
  %v1319 = vmul.f32 %v1191, 0.020408163
  %v1320 = vmul.f32 %v1194, 0.020408163
  %v1321 = vmul.f32 %v1197, 0.020408163
  %v1322 = vmul.f32 %v1200, 0.020408163
  %v1323 = vmul.f32 %v1203, 0.020408163
  %v1324 = vmul.f32 %v1206, 0.020408163
  %v1325 = vmul.f32 %v1209, 0.020408163
  %v1326 = vmul.f32 %v1212, 0.020408163
  %v1327 = vmul.f32 %v1215, 0.020408163
  %v1328 = vmul.f32 %v1218, 0.020408163
  %v1329 = vmul.f32 %v1221, 0.020408163
  %v1330 = vmul.f32 %v1224, 0.020408163
  %v1331 = vmul.f32 %v1227, 0.020408163
  %v1332 = vmul.f32 %v1230, 0.020408163
  %v1333 = vmul.f32 %v1233, 0.020408163
  %v1334 = vmul.f32 %v1236, 0.020408163
  %v1335 = vmul.f32 %v1239, 0.020408163
  %v1336 = vmul.f32 %v1242, 0.020408163
  %v1337 = vmul.f32 %v1245, 0.020408163
  %v1338 = vmul.f32 %v1248, 0.020408163
  %v1339 = vmul.f32 %v1251, 0.020408163
  %v1340 = vmul.f32 %v1254, 0.020408163
  %v1341 = vmul.f32 %v1257, 0.020408163
  %v1342 = vmul.f32 %v1260, 0.020408163
  %v1343 = vmul.f32 %v1263, 0.020408163
  %v1344 = vmul.f32 %v1266, 0.020408163
  %v1345 = vmul.f32 %v1269, 0.020408163
  %v1346 = vmul.f32 %v1272, 0.020408163
  %v1347 = vmul.f32 %v1275, 0.020408163
  %v1348 = vmul.f32 %v1278, 0.020408163
  %v1349 = vmul.f32 %v1281, 0.020408163
  %v1350 = vmul.f32 %v1284, 0.020408163
  %v1351 = vmul.f32 %v1287, 0.020408163
  %v1352 = vmul.f32 %v1290, 0.020408163
  %v1353 = vmul.f32 %v1293, 0.020408163
  %v1354 = vmul.f32 %v1296, 0.020408163
  %v1355 = vmul.f32 %v1299, 0.020408163
  %v1356 = vmul.f32 %v1302, 0.020408163
  %v1357 = vmul.f32 %v1305, 0.020408163
  %v1358 = vmul.f32 %v1308, 0.020408163
  %v1359 = vmul.f32 %v1034, %v1034
  %v1360 = vmul.f32 %v1036, %v1036
  %v1361 = vmul.f32 %v1039, %v1039
  %v1362 = vmul.f32 %v1041, %v1041
  %v1363 = vmul.f32 %v1044, %v1044
  %v1364 = vmul.f32 %v1046, %v1046
  %v1365 = vmul.f32 %v1049, %v1049
  %v1366 = vmul.f32 %v1051, %v1051
  %v1367 = vmul.f32 %v1054, %v1054
  %v1368 = vmul.f32 %v1056, %v1056
  %v1369 = vmul.f32 %v1059, %v1059
  %v1370 = vmul.f32 %v1061, %v1061
  %v1371 = vmul.f32 %v1064, %v1064
  %v1372 = vmul.f32 %v1066, %v1066
  %v1373 = vmul.f32 %v1069, %v1069
  %v1374 = vmul.f32 %v1071, %v1071
  %v1375 = vmul.f32 %v1074, %v1074
  %v1376 = vmul.f32 %v1076, %v1076
  %v1377 = vmul.f32 %v1079, %v1079
  %v1378 = vmul.f32 %v1081, %v1081
  %v1379 = vmul.f32 %v1084, %v1084
  %v1380 = vmul.f32 %v1086, %v1086
  %v1381 = vmul.f32 %v1089, %v1089
  %v1382 = vmul.f32 %v1091, %v1091
  %v1383 = vmul.f32 %v1094, %v1094
  %v1384 = vmul.f32 %v1096, %v1096
  %v1385 = vmul.f32 %v1099, %v1099
  %v1386 = vmul.f32 %v1101, %v1101
  %v1387 = vmul.f32 %v1104, %v1104
  %v1388 = vmul.f32 %v1106, %v1106
  %v1389 = vmul.f32 %v1109, %v1109
  %v1390 = vmul.f32 %v1111, %v1111
  %v1391 = vmul.f32 %v1114, %v1114
  %v1392 = vmul.f32 %v1116, %v1116
  %v1393 = vmul.f32 %v1119, %v1119
  %v1394 = vmul.f32 %v1121, %v1121
  %v1395 = vmul.f32 %v1124, %v1124
  %v1396 = vmul.f32 %v1126, %v1126
  %v1397 = vmul.f32 %v1129, %v1129
  %v1398 = vmul.f32 %v1131, %v1131
  %v1399 = vmul.f32 %v1134, %v1134
  %v1400 = vmul.f32 %v1136, %v1136
  %v1401 = vmul.f32 %v1139, %v1139
  %v1402 = vmul.f32 %v1141, %v1141
  %v1403 = vmul.f32 %v1144, %v1144
  %v1404 = vmul.f32 %v1146, %v1146
  %v1405 = vmul.f32 %v1149, %v1149
  %v1406 = vmul.f32 %v1151, %v1151
  %v1407 = vmul.f32 %v1154, %v1154
  %v1408 = vmul.f32 %v1156, %v1156
  %v1409 = vsel %vm1158, %v1359, 0.0
  %1410 = vadd.xlane.f32.xlu0 %v1409
  %v1411 = vpop.xlane.xlu0 %1410
  %v1412 = vsel %vm1158, %v1360, 0.0
  %1413 = vadd.xlane.f32.xlu0 %v1412
  %v1414 = vpop.xlane.xlu0 %1413
  %v1415 = vsel %vm1158, %v1361, 0.0
  %1416 = vadd.xlane.f32.xlu0 %v1415
  %v1417 = vpop.xlane.xlu0 %1416
  %v1418 = vsel %vm1158, %v1362, 0.0
  %1419 = vadd.xlane.f32.xlu0 %v1418
  %v1420 = vpop.xlane.xlu0 %1419
  %v1421 = vsel %vm1158, %v1363, 0.0
  %1422 = vadd.xlane.f32.xlu0 %v1421
  %v1423 = vpop.xlane.xlu0 %1422
  %v1424 = vsel %vm1158, %v1364, 0.0
  %1425 = vadd.xlane.f32.xlu0 %v1424
  %v1426 = vpop.xlane.xlu0 %1425
  %v1427 = vsel %vm1158, %v1365, 0.0
  %1428 = vadd.xlane.f32.xlu0 %v1427
  %v1429 = vpop.xlane.xlu0 %1428
  %v1430 = vsel %vm1158, %v1366, 0.0
  %1431 = vadd.xlane.f32.xlu0 %v1430
  %v1432 = vpop.xlane.xlu0 %1431
  %v1433 = vsel %vm1158, %v1367, 0.0
  %1434 = vadd.xlane.f32.xlu0 %v1433
  %v1435 = vpop.xlane.xlu0 %1434
  %v1436 = vsel %vm1158, %v1368, 0.0
  %1437 = vadd.xlane.f32.xlu0 %v1436
  %v1438 = vpop.xlane.xlu0 %1437
  %v1439 = vsel %vm1158, %v1369, 0.0
  %1440 = vadd.xlane.f32.xlu0 %v1439
  %v1441 = vpop.xlane.xlu0 %1440
  %v1442 = vsel %vm1158, %v1370, 0.0
  %1443 = vadd.xlane.f32.xlu0 %v1442
  %v1444 = vpop.xlane.xlu0 %1443
  %v1445 = vsel %vm1158, %v1371, 0.0
  %1446 = vadd.xlane.f32.xlu0 %v1445
  %v1447 = vpop.xlane.xlu0 %1446
  %v1448 = vsel %vm1158, %v1372, 0.0
  %1449 = vadd.xlane.f32.xlu0 %v1448
  %v1450 = vpop.xlane.xlu0 %1449
  %v1451 = vsel %vm1158, %v1373, 0.0
  %1452 = vadd.xlane.f32.xlu0 %v1451
  %v1453 = vpop.xlane.xlu0 %1452
  %v1454 = vsel %vm1158, %v1374, 0.0
  %1455 = vadd.xlane.f32.xlu0 %v1454
  %v1456 = vpop.xlane.xlu0 %1455
  %v1457 = vsel %vm1158, %v1375, 0.0
  %1458 = vadd.xlane.f32.xlu0 %v1457
  %v1459 = vpop.xlane.xlu0 %1458
  %v1460 = vsel %vm1158, %v1376, 0.0
  %1461 = vadd.xlane.f32.xlu0 %v1460
  %v1462 = vpop.xlane.xlu0 %1461
  %v1463 = vsel %vm1158, %v1377, 0.0
  %1464 = vadd.xlane.f32.xlu0 %v1463
  %v1465 = vpop.xlane.xlu0 %1464
  %v1466 = vsel %vm1158, %v1378, 0.0
  %1467 = vadd.xlane.f32.xlu0 %v1466
  %v1468 = vpop.xlane.xlu0 %1467
  %v1469 = vsel %vm1158, %v1379, 0.0
  %1470 = vadd.xlane.f32.xlu0 %v1469
  %v1471 = vpop.xlane.xlu0 %1470
  %v1472 = vsel %vm1158, %v1380, 0.0
  %1473 = vadd.xlane.f32.xlu0 %v1472
  %v1474 = vpop.xlane.xlu0 %1473
  %v1475 = vsel %vm1158, %v1381, 0.0
  %1476 = vadd.xlane.f32.xlu0 %v1475
  %v1477 = vpop.xlane.xlu0 %1476
  %v1478 = vsel %vm1158, %v1382, 0.0
  %1479 = vadd.xlane.f32.xlu0 %v1478
  %v1480 = vpop.xlane.xlu0 %1479
  %v1481 = vsel %vm1158, %v1383, 0.0
  %1482 = vadd.xlane.f32.xlu0 %v1481
  %v1483 = vpop.xlane.xlu0 %1482
  %v1484 = vsel %vm1158, %v1384, 0.0
  %1485 = vadd.xlane.f32.xlu0 %v1484
  %v1486 = vpop.xlane.xlu0 %1485
  %v1487 = vsel %vm1158, %v1385, 0.0
  %1488 = vadd.xlane.f32.xlu0 %v1487
  %v1489 = vpop.xlane.xlu0 %1488
  %v1490 = vsel %vm1158, %v1386, 0.0
  %1491 = vadd.xlane.f32.xlu0 %v1490
  %v1492 = vpop.xlane.xlu0 %1491
  %v1493 = vsel %vm1158, %v1387, 0.0
  %1494 = vadd.xlane.f32.xlu0 %v1493
  %v1495 = vpop.xlane.xlu0 %1494
  %v1496 = vsel %vm1158, %v1388, 0.0
  %1497 = vadd.xlane.f32.xlu0 %v1496
  %v1498 = vpop.xlane.xlu0 %1497
  %v1499 = vsel %vm1158, %v1389, 0.0
  %1500 = vadd.xlane.f32.xlu0 %v1499
  %v1501 = vpop.xlane.xlu0 %1500
  %v1502 = vsel %vm1158, %v1390, 0.0
  %1503 = vadd.xlane.f32.xlu0 %v1502
  %v1504 = vpop.xlane.xlu0 %1503
  %v1505 = vsel %vm1158, %v1391, 0.0
  %1506 = vadd.xlane.f32.xlu0 %v1505
  %v1507 = vpop.xlane.xlu0 %1506
  %v1508 = vsel %vm1158, %v1392, 0.0
  %1509 = vadd.xlane.f32.xlu0 %v1508
  %v1510 = vpop.xlane.xlu0 %1509
  %v1511 = vsel %vm1158, %v1393, 0.0
  %1512 = vadd.xlane.f32.xlu0 %v1511
  %v1513 = vpop.xlane.xlu0 %1512
  %v1514 = vsel %vm1158, %v1394, 0.0
  %1515 = vadd.xlane.f32.xlu0 %v1514
  %v1516 = vpop.xlane.xlu0 %1515
  %v1517 = vsel %vm1158, %v1395, 0.0
  %1518 = vadd.xlane.f32.xlu0 %v1517
  %v1519 = vpop.xlane.xlu0 %1518
  %v1520 = vsel %vm1158, %v1396, 0.0
  %1521 = vadd.xlane.f32.xlu0 %v1520
  %v1522 = vpop.xlane.xlu0 %1521
  %v1523 = vsel %vm1158, %v1397, 0.0
  %1524 = vadd.xlane.f32.xlu0 %v1523
  %v1525 = vpop.xlane.xlu0 %1524
  %v1526 = vsel %vm1158, %v1398, 0.0
  %1527 = vadd.xlane.f32.xlu0 %v1526
  %v1528 = vpop.xlane.xlu0 %1527
  %v1529 = vsel %vm1158, %v1399, 0.0
  %1530 = vadd.xlane.f32.xlu0 %v1529
  %v1531 = vpop.xlane.xlu0 %1530
  %v1532 = vsel %vm1158, %v1400, 0.0
  %1533 = vadd.xlane.f32.xlu0 %v1532
  %v1534 = vpop.xlane.xlu0 %1533
  %v1535 = vsel %vm1158, %v1401, 0.0
  %1536 = vadd.xlane.f32.xlu0 %v1535
  %v1537 = vpop.xlane.xlu0 %1536
  %v1538 = vsel %vm1158, %v1402, 0.0
  %1539 = vadd.xlane.f32.xlu0 %v1538
  %v1540 = vpop.xlane.xlu0 %1539
  %v1541 = vsel %vm1158, %v1403, 0.0
  %1542 = vadd.xlane.f32.xlu0 %v1541
  %v1543 = vpop.xlane.xlu0 %1542
  %v1544 = vsel %vm1158, %v1404, 0.0
  %1545 = vadd.xlane.f32.xlu0 %v1544
  %v1546 = vpop.xlane.xlu0 %1545
  %v1547 = vsel %vm1158, %v1405, 0.0
  %1548 = vadd.xlane.f32.xlu0 %v1547
  %v1549 = vpop.xlane.xlu0 %1548
  %v1550 = vsel %vm1158, %v1406, 0.0
  %1551 = vadd.xlane.f32.xlu0 %v1550
  %v1552 = vpop.xlane.xlu0 %1551
  %v1553 = vsel %vm1158, %v1407, 0.0
  %1554 = vadd.xlane.f32.xlu0 %v1553
  %v1555 = vpop.xlane.xlu0 %1554
  %v1556 = vsel %vm1158, %v1408, 0.0
  %1557 = vadd.xlane.f32.xlu0 %v1556
  %v1558 = vpop.xlane.xlu0 %1557
  %v1559 = vmul.f32 %v1411, 0.020408163
  %v1560 = vmul.f32 %v1414, 0.020408163
  %v1561 = vmul.f32 %v1417, 0.020408163
  %v1562 = vmul.f32 %v1420, 0.020408163
  %v1563 = vmul.f32 %v1423, 0.020408163
  %v1564 = vmul.f32 %v1426, 0.020408163
  %v1565 = vmul.f32 %v1429, 0.020408163
  %v1566 = vmul.f32 %v1432, 0.020408163
  %v1567 = vmul.f32 %v1435, 0.020408163
  %v1568 = vmul.f32 %v1438, 0.020408163
  %v1569 = vmul.f32 %v1441, 0.020408163
  %v1570 = vmul.f32 %v1444, 0.020408163
  %v1571 = vmul.f32 %v1447, 0.020408163
  %v1572 = vmul.f32 %v1450, 0.020408163
  %v1573 = vmul.f32 %v1453, 0.020408163
  %v1574 = vmul.f32 %v1456, 0.020408163
  %v1575 = vmul.f32 %v1459, 0.020408163
  %v1576 = vmul.f32 %v1462, 0.020408163
  %v1577 = vmul.f32 %v1465, 0.020408163
  %v1578 = vmul.f32 %v1468, 0.020408163
  %v1579 = vmul.f32 %v1471, 0.020408163
  %v1580 = vmul.f32 %v1474, 0.020408163
  %v1581 = vmul.f32 %v1477, 0.020408163
  %v1582 = vmul.f32 %v1480, 0.020408163
  %v1583 = vmul.f32 %v1483, 0.020408163
  %v1584 = vmul.f32 %v1486, 0.020408163
  %v1585 = vmul.f32 %v1489, 0.020408163
  %v1586 = vmul.f32 %v1492, 0.020408163
  %v1587 = vmul.f32 %v1495, 0.020408163
  %v1588 = vmul.f32 %v1498, 0.020408163
  %v1589 = vmul.f32 %v1501, 0.020408163
  %v1590 = vmul.f32 %v1504, 0.020408163
  %v1591 = vmul.f32 %v1507, 0.020408163
  %v1592 = vmul.f32 %v1510, 0.020408163
  %v1593 = vmul.f32 %v1513, 0.020408163
  %v1594 = vmul.f32 %v1516, 0.020408163
  %v1595 = vmul.f32 %v1519, 0.020408163
  %v1596 = vmul.f32 %v1522, 0.020408163
  %v1597 = vmul.f32 %v1525, 0.020408163
  %v1598 = vmul.f32 %v1528, 0.020408163
  %v1599 = vmul.f32 %v1531, 0.020408163
  %v1600 = vmul.f32 %v1534, 0.020408163
  %v1601 = vmul.f32 %v1537, 0.020408163
  %v1602 = vmul.f32 %v1540, 0.020408163
  %v1603 = vmul.f32 %v1543, 0.020408163
  %v1604 = vmul.f32 %v1546, 0.020408163
  %v1605 = vmul.f32 %v1549, 0.020408163
  %v1606 = vmul.f32 %v1552, 0.020408163
  %v1607 = vmul.f32 %v1555, 0.020408163
  %v1608 = vmul.f32 %v1558, 0.020408163
  %v1609 = vmul.f32 %v1309, %v1309
  %v1610 = vmul.f32 %v1310, %v1310
  %v1611 = vmul.f32 %v1311, %v1311
  %v1612 = vmul.f32 %v1312, %v1312
  %v1613 = vmul.f32 %v1313, %v1313
  %v1614 = vmul.f32 %v1314, %v1314
  %v1615 = vmul.f32 %v1315, %v1315
  %v1616 = vmul.f32 %v1316, %v1316
  %v1617 = vmul.f32 %v1317, %v1317
  %v1618 = vmul.f32 %v1318, %v1318
  %v1619 = vmul.f32 %v1319, %v1319
  %v1620 = vmul.f32 %v1320, %v1320
  %v1621 = vmul.f32 %v1321, %v1321
  %v1622 = vmul.f32 %v1322, %v1322
  %v1623 = vmul.f32 %v1323, %v1323
  %v1624 = vmul.f32 %v1324, %v1324
  %v1625 = vmul.f32 %v1325, %v1325
  %v1626 = vmul.f32 %v1326, %v1326
  %v1627 = vmul.f32 %v1327, %v1327
  %v1628 = vmul.f32 %v1328, %v1328
  %v1629 = vmul.f32 %v1329, %v1329
  %v1630 = vmul.f32 %v1330, %v1330
  %v1631 = vmul.f32 %v1331, %v1331
  %v1632 = vmul.f32 %v1332, %v1332
  %v1633 = vmul.f32 %v1333, %v1333
  %v1634 = vmul.f32 %v1334, %v1334
  %v1635 = vmul.f32 %v1335, %v1335
  %v1636 = vmul.f32 %v1336, %v1336
  %v1637 = vmul.f32 %v1337, %v1337
  %v1638 = vmul.f32 %v1338, %v1338
  %v1639 = vmul.f32 %v1339, %v1339
  %v1640 = vmul.f32 %v1340, %v1340
  %v1641 = vmul.f32 %v1341, %v1341
  %v1642 = vmul.f32 %v1342, %v1342
  %v1643 = vmul.f32 %v1343, %v1343
  %v1644 = vmul.f32 %v1344, %v1344
  %v1645 = vmul.f32 %v1345, %v1345
  %v1646 = vmul.f32 %v1346, %v1346
  %v1647 = vmul.f32 %v1347, %v1347
  %v1648 = vmul.f32 %v1348, %v1348
  %v1649 = vmul.f32 %v1349, %v1349
  %v1650 = vmul.f32 %v1350, %v1350
  %v1651 = vmul.f32 %v1351, %v1351
  %v1652 = vmul.f32 %v1352, %v1352
  %v1653 = vmul.f32 %v1353, %v1353
  %v1654 = vmul.f32 %v1354, %v1354
  %v1655 = vmul.f32 %v1355, %v1355
  %v1656 = vmul.f32 %v1356, %v1356
  %v1657 = vmul.f32 %v1357, %v1357
  %v1658 = vmul.f32 %v1358, %v1358
  %v1659 = vsub.f32 %v1559, %v1609
  %v1660 = vsub.f32 %v1560, %v1610
  %v1661 = vsub.f32 %v1561, %v1611
  %v1662 = vsub.f32 %v1562, %v1612
  %v1663 = vsub.f32 %v1563, %v1613
  %v1664 = vsub.f32 %v1564, %v1614
  %v1665 = vsub.f32 %v1565, %v1615
  %v1666 = vsub.f32 %v1566, %v1616
  %v1667 = vsub.f32 %v1567, %v1617
  %v1668 = vsub.f32 %v1568, %v1618
  %v1669 = vsub.f32 %v1569, %v1619
  %v1670 = vsub.f32 %v1570, %v1620
  %v1671 = vsub.f32 %v1571, %v1621
  %v1672 = vsub.f32 %v1572, %v1622
  %v1673 = vsub.f32 %v1573, %v1623
  %v1674 = vsub.f32 %v1574, %v1624
  %v1675 = vsub.f32 %v1575, %v1625
  %v1676 = vsub.f32 %v1576, %v1626
  %v1677 = vsub.f32 %v1577, %v1627
  %v1678 = vsub.f32 %v1578, %v1628
  %v1679 = vsub.f32 %v1579, %v1629
  %v1680 = vsub.f32 %v1580, %v1630
  %v1681 = vsub.f32 %v1581, %v1631
  %v1682 = vsub.f32 %v1582, %v1632
  %v1683 = vsub.f32 %v1583, %v1633
  %v1684 = vsub.f32 %v1584, %v1634
  %v1685 = vsub.f32 %v1585, %v1635
  %v1686 = vsub.f32 %v1586, %v1636
  %v1687 = vsub.f32 %v1587, %v1637
  %v1688 = vsub.f32 %v1588, %v1638
  %v1689 = vsub.f32 %v1589, %v1639
  %v1690 = vsub.f32 %v1590, %v1640
  %v1691 = vsub.f32 %v1591, %v1641
  %v1692 = vsub.f32 %v1592, %v1642
  %v1693 = vsub.f32 %v1593, %v1643
  %v1694 = vsub.f32 %v1594, %v1644
  %v1695 = vsub.f32 %v1595, %v1645
  %v1696 = vsub.f32 %v1596, %v1646
  %v1697 = vsub.f32 %v1597, %v1647
  %v1698 = vsub.f32 %v1598, %v1648
  %v1699 = vsub.f32 %v1599, %v1649
  %v1700 = vsub.f32 %v1600, %v1650
  %v1701 = vsub.f32 %v1601, %v1651
  %v1702 = vsub.f32 %v1602, %v1652
  %v1703 = vsub.f32 %v1603, %v1653
  %v1704 = vsub.f32 %v1604, %v1654
  %v1705 = vsub.f32 %v1605, %v1655
  %v1706 = vsub.f32 %v1606, %v1656
  %v1707 = vsub.f32 %v1607, %v1657
  %v1708 = vsub.f32 %v1608, %v1658
  %v1709 = vmax.f32 %v1659, 0.0
  %v1710 = vmax.f32 %v1660, 0.0
  %v1711 = vmax.f32 %v1661, 0.0
  %v1712 = vmax.f32 %v1662, 0.0
  %v1713 = vmax.f32 %v1663, 0.0
  %v1714 = vmax.f32 %v1664, 0.0
  %v1715 = vmax.f32 %v1665, 0.0
  %v1716 = vmax.f32 %v1666, 0.0
  %v1717 = vmax.f32 %v1667, 0.0
  %v1718 = vmax.f32 %v1668, 0.0
  %v1719 = vmax.f32 %v1669, 0.0
  %v1720 = vmax.f32 %v1670, 0.0
  %v1721 = vmax.f32 %v1671, 0.0
  %v1722 = vmax.f32 %v1672, 0.0
  %v1723 = vmax.f32 %v1673, 0.0
  %v1724 = vmax.f32 %v1674, 0.0
  %v1725 = vmax.f32 %v1675, 0.0
  %v1726 = vmax.f32 %v1676, 0.0
  %v1727 = vmax.f32 %v1677, 0.0
  %v1728 = vmax.f32 %v1678, 0.0
  %v1729 = vmax.f32 %v1679, 0.0
  %v1730 = vmax.f32 %v1680, 0.0
  %v1731 = vmax.f32 %v1681, 0.0
  %v1732 = vmax.f32 %v1682, 0.0
  %v1733 = vmax.f32 %v1683, 0.0
  %v1734 = vmax.f32 %v1684, 0.0
  %v1735 = vmax.f32 %v1685, 0.0
  %v1736 = vmax.f32 %v1686, 0.0
  %v1737 = vmax.f32 %v1687, 0.0
  %v1738 = vmax.f32 %v1688, 0.0
  %v1739 = vmax.f32 %v1689, 0.0
  %v1740 = vmax.f32 %v1690, 0.0
  %v1741 = vmax.f32 %v1691, 0.0
  %v1742 = vmax.f32 %v1692, 0.0
  %v1743 = vmax.f32 %v1693, 0.0
  %v1744 = vmax.f32 %v1694, 0.0
  %v1745 = vmax.f32 %v1695, 0.0
  %v1746 = vmax.f32 %v1696, 0.0
  %v1747 = vmax.f32 %v1697, 0.0
  %v1748 = vmax.f32 %v1698, 0.0
  %v1749 = vmax.f32 %v1699, 0.0
  %v1750 = vmax.f32 %v1700, 0.0
  %v1751 = vmax.f32 %v1701, 0.0
  %v1752 = vmax.f32 %v1702, 0.0
  %v1753 = vmax.f32 %v1703, 0.0
  %v1754 = vmax.f32 %v1704, 0.0
  %v1755 = vmax.f32 %v1705, 0.0
  %v1756 = vmax.f32 %v1706, 0.0
  %v1757 = vmax.f32 %v1707, 0.0
  %v1758 = vmax.f32 %v1708, 0.0
  %v1759 = vadd.f32 %v1709, 1e-05
  %v1760 = vadd.f32 %v1710, 1e-05
  %v1761 = vadd.f32 %v1711, 1e-05
  %v1762 = vadd.f32 %v1712, 1e-05
  %v1763 = vadd.f32 %v1713, 1e-05
  %v1764 = vadd.f32 %v1714, 1e-05
  %v1765 = vadd.f32 %v1715, 1e-05
  %v1766 = vadd.f32 %v1716, 1e-05
  %v1767 = vadd.f32 %v1717, 1e-05
  %v1768 = vadd.f32 %v1718, 1e-05
  %v1769 = vadd.f32 %v1719, 1e-05
  %v1770 = vadd.f32 %v1720, 1e-05
  %v1771 = vadd.f32 %v1721, 1e-05
  %v1772 = vadd.f32 %v1722, 1e-05
  %v1773 = vadd.f32 %v1723, 1e-05
  %v1774 = vadd.f32 %v1724, 1e-05
  %v1775 = vadd.f32 %v1725, 1e-05
  %v1776 = vadd.f32 %v1726, 1e-05
  %v1777 = vadd.f32 %v1727, 1e-05
  %v1778 = vadd.f32 %v1728, 1e-05
  %v1779 = vadd.f32 %v1729, 1e-05
  %v1780 = vadd.f32 %v1730, 1e-05
  %v1781 = vadd.f32 %v1731, 1e-05
  %v1782 = vadd.f32 %v1732, 1e-05
  %v1783 = vadd.f32 %v1733, 1e-05
  %v1784 = vadd.f32 %v1734, 1e-05
  %v1785 = vadd.f32 %v1735, 1e-05
  %v1786 = vadd.f32 %v1736, 1e-05
  %v1787 = vadd.f32 %v1737, 1e-05
  %v1788 = vadd.f32 %v1738, 1e-05
  %v1789 = vadd.f32 %v1739, 1e-05
  %v1790 = vadd.f32 %v1740, 1e-05
  %v1791 = vadd.f32 %v1741, 1e-05
  %v1792 = vadd.f32 %v1742, 1e-05
  %v1793 = vadd.f32 %v1743, 1e-05
  %v1794 = vadd.f32 %v1744, 1e-05
  %v1795 = vadd.f32 %v1745, 1e-05
  %v1796 = vadd.f32 %v1746, 1e-05
  %v1797 = vadd.f32 %v1747, 1e-05
  %v1798 = vadd.f32 %v1748, 1e-05
  %v1799 = vadd.f32 %v1749, 1e-05
  %v1800 = vadd.f32 %v1750, 1e-05
  %v1801 = vadd.f32 %v1751, 1e-05
  %v1802 = vadd.f32 %v1752, 1e-05
  %v1803 = vadd.f32 %v1753, 1e-05
  %v1804 = vadd.f32 %v1754, 1e-05
  %v1805 = vadd.f32 %v1755, 1e-05
  %v1806 = vadd.f32 %v1756, 1e-05
  %v1807 = vadd.f32 %v1757, 1e-05
  %v1808 = vadd.f32 %v1758, 1e-05
  %v1809 = vrsqrt.pop %v1759
  %v1810 = vmul.f32 %v1809, %v1759
  %v1811 = vmul.f32 %v1810, %v1809
  %v1812 = vmul.f32 0.5, %v1811
  %v1813 = vsub.f32 1.5, %v1812
  %v1814 = vmul.f32 %v1809, %v1813
  %vm1815 = vweird.f32 %v1759
  %vm1816 = vweird.f32 %v1809
  %vm1817 = vmor %vm1815, %vm1816
  %v1818 = vsel %vm1817, %v1809, %v1814
  %v1819 = vrsqrt.pop %v1760
  %v1820 = vmul.f32 %v1819, %v1760
  %v1821 = vmul.f32 %v1820, %v1819
  %v1822 = vmul.f32 0.5, %v1821
  %v1823 = vsub.f32 1.5, %v1822
  %v1824 = vmul.f32 %v1819, %v1823
  %vm1825 = vweird.f32 %v1760
  %vm1826 = vweird.f32 %v1819
  %vm1827 = vmor %vm1825, %vm1826
  %v1828 = vsel %vm1827, %v1819, %v1824
  %v1829 = vrsqrt.pop %v1761
  %v1830 = vmul.f32 %v1829, %v1761
  %v1831 = vmul.f32 %v1830, %v1829
  %v1832 = vmul.f32 0.5, %v1831
  %v1833 = vsub.f32 1.5, %v1832
  %v1834 = vmul.f32 %v1829, %v1833
  %vm1835 = vweird.f32 %v1761
  %vm1836 = vweird.f32 %v1829
  %vm1837 = vmor %vm1835, %vm1836
  %v1838 = vsel %vm1837, %v1829, %v1834
  %v1839 = vrsqrt.pop %v1762
  %v1840 = vmul.f32 %v1839, %v1762
  %v1841 = vmul.f32 %v1840, %v1839
  %v1842 = vmul.f32 0.5, %v1841
  %v1843 = vsub.f32 1.5, %v1842
  %v1844 = vmul.f32 %v1839, %v1843
  %vm1845 = vweird.f32 %v1762
  %vm1846 = vweird.f32 %v1839
  %vm1847 = vmor %vm1845, %vm1846
  %v1848 = vsel %vm1847, %v1839, %v1844
  %v1849 = vrsqrt.pop %v1763
  %v1850 = vmul.f32 %v1849, %v1763
  %v1851 = vmul.f32 %v1850, %v1849
  %v1852 = vmul.f32 0.5, %v1851
  %v1853 = vsub.f32 1.5, %v1852
  %v1854 = vmul.f32 %v1849, %v1853
  %vm1855 = vweird.f32 %v1763
  %vm1856 = vweird.f32 %v1849
  %vm1857 = vmor %vm1855, %vm1856
  %v1858 = vsel %vm1857, %v1849, %v1854
  %v1859 = vrsqrt.pop %v1764
  %v1860 = vmul.f32 %v1859, %v1764
  %v1861 = vmul.f32 %v1860, %v1859
  %v1862 = vmul.f32 0.5, %v1861
  %v1863 = vsub.f32 1.5, %v1862
  %v1864 = vmul.f32 %v1859, %v1863
  %vm1865 = vweird.f32 %v1764
  %vm1866 = vweird.f32 %v1859
  %vm1867 = vmor %vm1865, %vm1866
  %v1868 = vsel %vm1867, %v1859, %v1864
  %v1869 = vrsqrt.pop %v1765
  %v1870 = vmul.f32 %v1869, %v1765
  %v1871 = vmul.f32 %v1870, %v1869
  %v1872 = vmul.f32 0.5, %v1871
  %v1873 = vsub.f32 1.5, %v1872
  %v1874 = vmul.f32 %v1869, %v1873
  %vm1875 = vweird.f32 %v1765
  %vm1876 = vweird.f32 %v1869
  %vm1877 = vmor %vm1875, %vm1876
  %v1878 = vsel %vm1877, %v1869, %v1874
  %v1879 = vrsqrt.pop %v1766
  %v1880 = vmul.f32 %v1879, %v1766
  %v1881 = vmul.f32 %v1880, %v1879
  %v1882 = vmul.f32 0.5, %v1881
  %v1883 = vsub.f32 1.5, %v1882
  %v1884 = vmul.f32 %v1879, %v1883
  %vm1885 = vweird.f32 %v1766
  %vm1886 = vweird.f32 %v1879
  %vm1887 = vmor %vm1885, %vm1886
  %v1888 = vsel %vm1887, %v1879, %v1884
  %v1889 = vrsqrt.pop %v1767
  %v1890 = vmul.f32 %v1889, %v1767
  %v1891 = vmul.f32 %v1890, %v1889
  %v1892 = vmul.f32 0.5, %v1891
  %v1893 = vsub.f32 1.5, %v1892
  %v1894 = vmul.f32 %v1889, %v1893
  %vm1895 = vweird.f32 %v1767
  %vm1896 = vweird.f32 %v1889
  %vm1897 = vmor %vm1895, %vm1896
  %v1898 = vsel %vm1897, %v1889, %v1894
  %v1899 = vrsqrt.pop %v1768
  %v1900 = vmul.f32 %v1899, %v1768
  %v1901 = vmul.f32 %v1900, %v1899
  %v1902 = vmul.f32 0.5, %v1901
  %v1903 = vsub.f32 1.5, %v1902
  %v1904 = vmul.f32 %v1899, %v1903
  %vm1905 = vweird.f32 %v1768
  %vm1906 = vweird.f32 %v1899
  %vm1907 = vmor %vm1905, %vm1906
  %v1908 = vsel %vm1907, %v1899, %v1904
  %v1909 = vrsqrt.pop %v1769
  %v1910 = vmul.f32 %v1909, %v1769
  %v1911 = vmul.f32 %v1910, %v1909
  %v1912 = vmul.f32 0.5, %v1911
  %v1913 = vsub.f32 1.5, %v1912
  %v1914 = vmul.f32 %v1909, %v1913
  %vm1915 = vweird.f32 %v1769
  %vm1916 = vweird.f32 %v1909
  %vm1917 = vmor %vm1915, %vm1916
  %v1918 = vsel %vm1917, %v1909, %v1914
  %v1919 = vrsqrt.pop %v1770
  %v1920 = vmul.f32 %v1919, %v1770
  %v1921 = vmul.f32 %v1920, %v1919
  %v1922 = vmul.f32 0.5, %v1921
  %v1923 = vsub.f32 1.5, %v1922
  %v1924 = vmul.f32 %v1919, %v1923
  %vm1925 = vweird.f32 %v1770
  %vm1926 = vweird.f32 %v1919
  %vm1927 = vmor %vm1925, %vm1926
  %v1928 = vsel %vm1927, %v1919, %v1924
  %v1929 = vrsqrt.pop %v1771
  %v1930 = vmul.f32 %v1929, %v1771
  %v1931 = vmul.f32 %v1930, %v1929
  %v1932 = vmul.f32 0.5, %v1931
  %v1933 = vsub.f32 1.5, %v1932
  %v1934 = vmul.f32 %v1929, %v1933
  %vm1935 = vweird.f32 %v1771
  %vm1936 = vweird.f32 %v1929
  %vm1937 = vmor %vm1935, %vm1936
  %v1938 = vsel %vm1937, %v1929, %v1934
  %v1939 = vrsqrt.pop %v1772
  %v1940 = vmul.f32 %v1939, %v1772
  %v1941 = vmul.f32 %v1940, %v1939
  %v1942 = vmul.f32 0.5, %v1941
  %v1943 = vsub.f32 1.5, %v1942
  %v1944 = vmul.f32 %v1939, %v1943
  %vm1945 = vweird.f32 %v1772
  %vm1946 = vweird.f32 %v1939
  %vm1947 = vmor %vm1945, %vm1946
  %v1948 = vsel %vm1947, %v1939, %v1944
  %v1949 = vrsqrt.pop %v1773
  %v1950 = vmul.f32 %v1949, %v1773
  %v1951 = vmul.f32 %v1950, %v1949
  %v1952 = vmul.f32 0.5, %v1951
  %v1953 = vsub.f32 1.5, %v1952
  %v1954 = vmul.f32 %v1949, %v1953
  %vm1955 = vweird.f32 %v1773
  %vm1956 = vweird.f32 %v1949
  %vm1957 = vmor %vm1955, %vm1956
  %v1958 = vsel %vm1957, %v1949, %v1954
  %v1959 = vrsqrt.pop %v1774
  %v1960 = vmul.f32 %v1959, %v1774
  %v1961 = vmul.f32 %v1960, %v1959
  %v1962 = vmul.f32 0.5, %v1961
  %v1963 = vsub.f32 1.5, %v1962
  %v1964 = vmul.f32 %v1959, %v1963
  %vm1965 = vweird.f32 %v1774
  %vm1966 = vweird.f32 %v1959
  %vm1967 = vmor %vm1965, %vm1966
  %v1968 = vsel %vm1967, %v1959, %v1964
  %v1969 = vrsqrt.pop %v1775
  %v1970 = vmul.f32 %v1969, %v1775
  %v1971 = vmul.f32 %v1970, %v1969
  %v1972 = vmul.f32 0.5, %v1971
  %v1973 = vsub.f32 1.5, %v1972
  %v1974 = vmul.f32 %v1969, %v1973
  %vm1975 = vweird.f32 %v1775
  %vm1976 = vweird.f32 %v1969
  %vm1977 = vmor %vm1975, %vm1976
  %v1978 = vsel %vm1977, %v1969, %v1974
  %v1979 = vrsqrt.pop %v1776
  %v1980 = vmul.f32 %v1979, %v1776
  %v1981 = vmul.f32 %v1980, %v1979
  %v1982 = vmul.f32 0.5, %v1981
  %v1983 = vsub.f32 1.5, %v1982
  %v1984 = vmul.f32 %v1979, %v1983
  %vm1985 = vweird.f32 %v1776
  %vm1986 = vweird.f32 %v1979
  %vm1987 = vmor %vm1985, %vm1986
  %v1988 = vsel %vm1987, %v1979, %v1984
  %v1989 = vrsqrt.pop %v1777
  %v1990 = vmul.f32 %v1989, %v1777
  %v1991 = vmul.f32 %v1990, %v1989
  %v1992 = vmul.f32 0.5, %v1991
  %v1993 = vsub.f32 1.5, %v1992
  %v1994 = vmul.f32 %v1989, %v1993
  %vm1995 = vweird.f32 %v1777
  %vm1996 = vweird.f32 %v1989
  %vm1997 = vmor %vm1995, %vm1996
  %v1998 = vsel %vm1997, %v1989, %v1994
  %v1999 = vrsqrt.pop %v1778
  %v2000 = vmul.f32 %v1999, %v1778
  %v2001 = vmul.f32 %v2000, %v1999
  %v2002 = vmul.f32 0.5, %v2001
  %v2003 = vsub.f32 1.5, %v2002
  %v2004 = vmul.f32 %v1999, %v2003
  %vm2005 = vweird.f32 %v1778
  %vm2006 = vweird.f32 %v1999
  %vm2007 = vmor %vm2005, %vm2006
  %v2008 = vsel %vm2007, %v1999, %v2004
  %v2009 = vrsqrt.pop %v1779
  %v2010 = vmul.f32 %v2009, %v1779
  %v2011 = vmul.f32 %v2010, %v2009
  %v2012 = vmul.f32 0.5, %v2011
  %v2013 = vsub.f32 1.5, %v2012
  %v2014 = vmul.f32 %v2009, %v2013
  %vm2015 = vweird.f32 %v1779
  %vm2016 = vweird.f32 %v2009
  %vm2017 = vmor %vm2015, %vm2016
  %v2018 = vsel %vm2017, %v2009, %v2014
  %v2019 = vrsqrt.pop %v1780
  %v2020 = vmul.f32 %v2019, %v1780
  %v2021 = vmul.f32 %v2020, %v2019
  %v2022 = vmul.f32 0.5, %v2021
  %v2023 = vsub.f32 1.5, %v2022
  %v2024 = vmul.f32 %v2019, %v2023
  %vm2025 = vweird.f32 %v1780
  %vm2026 = vweird.f32 %v2019
  %vm2027 = vmor %vm2025, %vm2026
  %v2028 = vsel %vm2027, %v2019, %v2024
  %v2029 = vrsqrt.pop %v1781
  %v2030 = vmul.f32 %v2029, %v1781
  %v2031 = vmul.f32 %v2030, %v2029
  %v2032 = vmul.f32 0.5, %v2031
  %v2033 = vsub.f32 1.5, %v2032
  %v2034 = vmul.f32 %v2029, %v2033
  %vm2035 = vweird.f32 %v1781
  %vm2036 = vweird.f32 %v2029
  %vm2037 = vmor %vm2035, %vm2036
  %v2038 = vsel %vm2037, %v2029, %v2034
  %v2039 = vrsqrt.pop %v1782
  %v2040 = vmul.f32 %v2039, %v1782
  %v2041 = vmul.f32 %v2040, %v2039
  %v2042 = vmul.f32 0.5, %v2041
  %v2043 = vsub.f32 1.5, %v2042
  %v2044 = vmul.f32 %v2039, %v2043
  %vm2045 = vweird.f32 %v1782
  %vm2046 = vweird.f32 %v2039
  %vm2047 = vmor %vm2045, %vm2046
  %v2048 = vsel %vm2047, %v2039, %v2044
  %v2049 = vrsqrt.pop %v1783
  %v2050 = vmul.f32 %v2049, %v1783
  %v2051 = vmul.f32 %v2050, %v2049
  %v2052 = vmul.f32 0.5, %v2051
  %v2053 = vsub.f32 1.5, %v2052
  %v2054 = vmul.f32 %v2049, %v2053
  %vm2055 = vweird.f32 %v1783
  %vm2056 = vweird.f32 %v2049
  %vm2057 = vmor %vm2055, %vm2056
  %v2058 = vsel %vm2057, %v2049, %v2054
  %v2059 = vrsqrt.pop %v1784
  %v2060 = vmul.f32 %v2059, %v1784
  %v2061 = vmul.f32 %v2060, %v2059
  %v2062 = vmul.f32 0.5, %v2061
  %v2063 = vsub.f32 1.5, %v2062
  %v2064 = vmul.f32 %v2059, %v2063
  %vm2065 = vweird.f32 %v1784
  %vm2066 = vweird.f32 %v2059
  %vm2067 = vmor %vm2065, %vm2066
  %v2068 = vsel %vm2067, %v2059, %v2064
  %v2069 = vrsqrt.pop %v1785
  %v2070 = vmul.f32 %v2069, %v1785
  %v2071 = vmul.f32 %v2070, %v2069
  %v2072 = vmul.f32 0.5, %v2071
  %v2073 = vsub.f32 1.5, %v2072
  %v2074 = vmul.f32 %v2069, %v2073
  %vm2075 = vweird.f32 %v1785
  %vm2076 = vweird.f32 %v2069
  %vm2077 = vmor %vm2075, %vm2076
  %v2078 = vsel %vm2077, %v2069, %v2074
  %v2079 = vrsqrt.pop %v1786
  %v2080 = vmul.f32 %v2079, %v1786
  %v2081 = vmul.f32 %v2080, %v2079
  %v2082 = vmul.f32 0.5, %v2081
  %v2083 = vsub.f32 1.5, %v2082
  %v2084 = vmul.f32 %v2079, %v2083
  %vm2085 = vweird.f32 %v1786
  %vm2086 = vweird.f32 %v2079
  %vm2087 = vmor %vm2085, %vm2086
  %v2088 = vsel %vm2087, %v2079, %v2084
  %v2089 = vrsqrt.pop %v1787
  %v2090 = vmul.f32 %v2089, %v1787
  %v2091 = vmul.f32 %v2090, %v2089
  %v2092 = vmul.f32 0.5, %v2091
  %v2093 = vsub.f32 1.5, %v2092
  %v2094 = vmul.f32 %v2089, %v2093
  %vm2095 = vweird.f32 %v1787
  %vm2096 = vweird.f32 %v2089
  %vm2097 = vmor %vm2095, %vm2096
  %v2098 = vsel %vm2097, %v2089, %v2094
  %v2099 = vrsqrt.pop %v1788
  %v2100 = vmul.f32 %v2099, %v1788
  %v2101 = vmul.f32 %v2100, %v2099
  %v2102 = vmul.f32 0.5, %v2101
  %v2103 = vsub.f32 1.5, %v2102
  %v2104 = vmul.f32 %v2099, %v2103
  %vm2105 = vweird.f32 %v1788
  %vm2106 = vweird.f32 %v2099
  %vm2107 = vmor %vm2105, %vm2106
  %v2108 = vsel %vm2107, %v2099, %v2104
  %v2109 = vrsqrt.pop %v1789
  %v2110 = vmul.f32 %v2109, %v1789
  %v2111 = vmul.f32 %v2110, %v2109
  %v2112 = vmul.f32 0.5, %v2111
  %v2113 = vsub.f32 1.5, %v2112
  %v2114 = vmul.f32 %v2109, %v2113
  %vm2115 = vweird.f32 %v1789
  %vm2116 = vweird.f32 %v2109
  %vm2117 = vmor %vm2115, %vm2116
  %v2118 = vsel %vm2117, %v2109, %v2114
  %v2119 = vrsqrt.pop %v1790
  %v2120 = vmul.f32 %v2119, %v1790
  %v2121 = vmul.f32 %v2120, %v2119
  %v2122 = vmul.f32 0.5, %v2121
  %v2123 = vsub.f32 1.5, %v2122
  %v2124 = vmul.f32 %v2119, %v2123
  %vm2125 = vweird.f32 %v1790
  %vm2126 = vweird.f32 %v2119
  %vm2127 = vmor %vm2125, %vm2126
  %v2128 = vsel %vm2127, %v2119, %v2124
  %v2129 = vrsqrt.pop %v1791
  %v2130 = vmul.f32 %v2129, %v1791
  %v2131 = vmul.f32 %v2130, %v2129
  %v2132 = vmul.f32 0.5, %v2131
  %v2133 = vsub.f32 1.5, %v2132
  %v2134 = vmul.f32 %v2129, %v2133
  %vm2135 = vweird.f32 %v1791
  %vm2136 = vweird.f32 %v2129
  %vm2137 = vmor %vm2135, %vm2136
  %v2138 = vsel %vm2137, %v2129, %v2134
  %v2139 = vrsqrt.pop %v1792
  %v2140 = vmul.f32 %v2139, %v1792
  %v2141 = vmul.f32 %v2140, %v2139
  %v2142 = vmul.f32 0.5, %v2141
  %v2143 = vsub.f32 1.5, %v2142
  %v2144 = vmul.f32 %v2139, %v2143
  %vm2145 = vweird.f32 %v1792
  %vm2146 = vweird.f32 %v2139
  %vm2147 = vmor %vm2145, %vm2146
  %v2148 = vsel %vm2147, %v2139, %v2144
  %v2149 = vrsqrt.pop %v1793
  %v2150 = vmul.f32 %v2149, %v1793
  %v2151 = vmul.f32 %v2150, %v2149
  %v2152 = vmul.f32 0.5, %v2151
  %v2153 = vsub.f32 1.5, %v2152
  %v2154 = vmul.f32 %v2149, %v2153
  %vm2155 = vweird.f32 %v1793
  %vm2156 = vweird.f32 %v2149
  %vm2157 = vmor %vm2155, %vm2156
  %v2158 = vsel %vm2157, %v2149, %v2154
  %v2159 = vrsqrt.pop %v1794
  %v2160 = vmul.f32 %v2159, %v1794
  %v2161 = vmul.f32 %v2160, %v2159
  %v2162 = vmul.f32 0.5, %v2161
  %v2163 = vsub.f32 1.5, %v2162
  %v2164 = vmul.f32 %v2159, %v2163
  %vm2165 = vweird.f32 %v1794
  %vm2166 = vweird.f32 %v2159
  %vm2167 = vmor %vm2165, %vm2166
  %v2168 = vsel %vm2167, %v2159, %v2164
  %v2169 = vrsqrt.pop %v1795
  %v2170 = vmul.f32 %v2169, %v1795
  %v2171 = vmul.f32 %v2170, %v2169
  %v2172 = vmul.f32 0.5, %v2171
  %v2173 = vsub.f32 1.5, %v2172
  %v2174 = vmul.f32 %v2169, %v2173
  %vm2175 = vweird.f32 %v1795
  %vm2176 = vweird.f32 %v2169
  %vm2177 = vmor %vm2175, %vm2176
  %v2178 = vsel %vm2177, %v2169, %v2174
  %v2179 = vrsqrt.pop %v1796
  %v2180 = vmul.f32 %v2179, %v1796
  %v2181 = vmul.f32 %v2180, %v2179
  %v2182 = vmul.f32 0.5, %v2181
  %v2183 = vsub.f32 1.5, %v2182
  %v2184 = vmul.f32 %v2179, %v2183
  %vm2185 = vweird.f32 %v1796
  %vm2186 = vweird.f32 %v2179
  %vm2187 = vmor %vm2185, %vm2186
  %v2188 = vsel %vm2187, %v2179, %v2184
  %v2189 = vrsqrt.pop %v1797
  %v2190 = vmul.f32 %v2189, %v1797
  %v2191 = vmul.f32 %v2190, %v2189
  %v2192 = vmul.f32 0.5, %v2191
  %v2193 = vsub.f32 1.5, %v2192
  %v2194 = vmul.f32 %v2189, %v2193
  %vm2195 = vweird.f32 %v1797
  %vm2196 = vweird.f32 %v2189
  %vm2197 = vmor %vm2195, %vm2196
  %v2198 = vsel %vm2197, %v2189, %v2194
  %v2199 = vrsqrt.pop %v1798
  %v2200 = vmul.f32 %v2199, %v1798
  %v2201 = vmul.f32 %v2200, %v2199
  %v2202 = vmul.f32 0.5, %v2201
  %v2203 = vsub.f32 1.5, %v2202
  %v2204 = vmul.f32 %v2199, %v2203
  %vm2205 = vweird.f32 %v1798
  %vm2206 = vweird.f32 %v2199
  %vm2207 = vmor %vm2205, %vm2206
  %v2208 = vsel %vm2207, %v2199, %v2204
  %v2209 = vrsqrt.pop %v1799
  %v2210 = vmul.f32 %v2209, %v1799
  %v2211 = vmul.f32 %v2210, %v2209
  %v2212 = vmul.f32 0.5, %v2211
  %v2213 = vsub.f32 1.5, %v2212
  %v2214 = vmul.f32 %v2209, %v2213
  %vm2215 = vweird.f32 %v1799
  %vm2216 = vweird.f32 %v2209
  %vm2217 = vmor %vm2215, %vm2216
  %v2218 = vsel %vm2217, %v2209, %v2214
  %v2219 = vrsqrt.pop %v1800
  %v2220 = vmul.f32 %v2219, %v1800
  %v2221 = vmul.f32 %v2220, %v2219
  %v2222 = vmul.f32 0.5, %v2221
  %v2223 = vsub.f32 1.5, %v2222
  %v2224 = vmul.f32 %v2219, %v2223
  %vm2225 = vweird.f32 %v1800
  %vm2226 = vweird.f32 %v2219
  %vm2227 = vmor %vm2225, %vm2226
  %v2228 = vsel %vm2227, %v2219, %v2224
  %v2229 = vrsqrt.pop %v1801
  %v2230 = vmul.f32 %v2229, %v1801
  %v2231 = vmul.f32 %v2230, %v2229
  %v2232 = vmul.f32 0.5, %v2231
  %v2233 = vsub.f32 1.5, %v2232
  %v2234 = vmul.f32 %v2229, %v2233
  %vm2235 = vweird.f32 %v1801
  %vm2236 = vweird.f32 %v2229
  %vm2237 = vmor %vm2235, %vm2236
  %v2238 = vsel %vm2237, %v2229, %v2234
  %v2239 = vrsqrt.pop %v1802
  %v2240 = vmul.f32 %v2239, %v1802
  %v2241 = vmul.f32 %v2240, %v2239
  %v2242 = vmul.f32 0.5, %v2241
  %v2243 = vsub.f32 1.5, %v2242
  %v2244 = vmul.f32 %v2239, %v2243
  %vm2245 = vweird.f32 %v1802
  %vm2246 = vweird.f32 %v2239
  %vm2247 = vmor %vm2245, %vm2246
  %v2248 = vsel %vm2247, %v2239, %v2244
  %v2249 = vrsqrt.pop %v1803
  %v2250 = vmul.f32 %v2249, %v1803
  %v2251 = vmul.f32 %v2250, %v2249
  %v2252 = vmul.f32 0.5, %v2251
  %v2253 = vsub.f32 1.5, %v2252
  %v2254 = vmul.f32 %v2249, %v2253
  %vm2255 = vweird.f32 %v1803
  %vm2256 = vweird.f32 %v2249
  %vm2257 = vmor %vm2255, %vm2256
  %v2258 = vsel %vm2257, %v2249, %v2254
  %v2259 = vrsqrt.pop %v1804
  %v2260 = vmul.f32 %v2259, %v1804
  %v2261 = vmul.f32 %v2260, %v2259
  %v2262 = vmul.f32 0.5, %v2261
  %v2263 = vsub.f32 1.5, %v2262
  %v2264 = vmul.f32 %v2259, %v2263
  %vm2265 = vweird.f32 %v1804
  %vm2266 = vweird.f32 %v2259
  %vm2267 = vmor %vm2265, %vm2266
  %v2268 = vsel %vm2267, %v2259, %v2264
  %v2269 = vrsqrt.pop %v1805
  %v2270 = vmul.f32 %v2269, %v1805
  %v2271 = vmul.f32 %v2270, %v2269
  %v2272 = vmul.f32 0.5, %v2271
  %v2273 = vsub.f32 1.5, %v2272
  %v2274 = vmul.f32 %v2269, %v2273
  %vm2275 = vweird.f32 %v1805
  %vm2276 = vweird.f32 %v2269
  %vm2277 = vmor %vm2275, %vm2276
  %v2278 = vsel %vm2277, %v2269, %v2274
  %v2279 = vrsqrt.pop %v1806
  %v2280 = vmul.f32 %v2279, %v1806
  %v2281 = vmul.f32 %v2280, %v2279
  %v2282 = vmul.f32 0.5, %v2281
  %v2283 = vsub.f32 1.5, %v2282
  %v2284 = vmul.f32 %v2279, %v2283
  %vm2285 = vweird.f32 %v1806
  %vm2286 = vweird.f32 %v2279
  %vm2287 = vmor %vm2285, %vm2286
  %v2288 = vsel %vm2287, %v2279, %v2284
  %v2289 = vrsqrt.pop %v1807
  %v2290 = vmul.f32 %v2289, %v1807
  %v2291 = vmul.f32 %v2290, %v2289
  %v2292 = vmul.f32 0.5, %v2291
  %v2293 = vsub.f32 1.5, %v2292
  %v2294 = vmul.f32 %v2289, %v2293
  %vm2295 = vweird.f32 %v1807
  %vm2296 = vweird.f32 %v2289
  %vm2297 = vmor %vm2295, %vm2296
  %v2298 = vsel %vm2297, %v2289, %v2294
  %v2299 = vrsqrt.pop %v1808
  %v2300 = vmul.f32 %v2299, %v1808
  %v2301 = vmul.f32 %v2300, %v2299
  %v2302 = vmul.f32 0.5, %v2301
  %v2303 = vsub.f32 1.5, %v2302
  %v2304 = vmul.f32 %v2299, %v2303
  %vm2305 = vweird.f32 %v1808
  %vm2306 = vweird.f32 %v2299
  %vm2307 = vmor %vm2305, %vm2306
  %v2308 = vsel %vm2307, %v2299, %v2304
  %v2309 = vld [vmem:[%s3] sm:$0xff]
  %v2310 = vld [vmem:[%s3 + $0x8] sm:$0xff]
  %v2311 = vld [vmem:[%s3 + $0x10] sm:$0xff]
  %v2312 = vld [vmem:[%s3 + $0x18] sm:$0xff]
  %v2313 = vld [vmem:[%s3 + $0x20] sm:$0xff]
  %v2314 = vld [vmem:[%s3 + $0x28] sm:$0xff]
  %v2315 = vld [vmem:[%s3 + $0x30] sm:$0xff]
  %v2316 = vld [vmem:[%s3 + $0x38] sm:$0xff]
  %v2317 = vld [vmem:[%s3 + $0x40] sm:$0xff]
  %v2318 = vld [vmem:[%s3 + $0x48] sm:$0xff]
  %v2319 = vld [vmem:[%s3 + $0x50] sm:$0xff]
  %v2320 = vld [vmem:[%s3 + $0x58] sm:$0xff]
  %v2321 = vld [vmem:[%s3 + $0x60] sm:$0xff]
  %v2322 = vld [vmem:[%s3 + $0x68] sm:$0xff]
  %v2323 = vld [vmem:[%s3 + $0x70] sm:$0xff]
  %v2324 = vld [vmem:[%s3 + $0x78] sm:$0xff]
  %v2325 = vld [vmem:[%s3 + $0x80] sm:$0xff]
  %v2326 = vld [vmem:[%s3 + $0x88] sm:$0xff]
  %v2327 = vld [vmem:[%s3 + $0x90] sm:$0xff]
  %v2328 = vld [vmem:[%s3 + $0x98] sm:$0xff]
  %v2329 = vld [vmem:[%s3 + $0xa0] sm:$0xff]
  %v2330 = vld [vmem:[%s3 + $0xa8] sm:$0xff]
  %v2331 = vld [vmem:[%s3 + $0xb0] sm:$0xff]
  %v2332 = vld [vmem:[%s3 + $0xb8] sm:$0xff]
  %v2333 = vld [vmem:[%s3 + $0xc0] sm:$0xff]
  %v2334 = vld [vmem:[%s3 + $0xc8] sm:$0xff]
  %v2335 = vld [vmem:[%s3 + $0xd0] sm:$0xff]
  %v2336 = vld [vmem:[%s3 + $0xd8] sm:$0xff]
  %v2337 = vld [vmem:[%s3 + $0xe0] sm:$0xff]
  %v2338 = vld [vmem:[%s3 + $0xe8] sm:$0xff]
  %v2339 = vld [vmem:[%s3 + $0xf0] sm:$0xff]
  %v2340 = vld [vmem:[%s3 + $0xf8] sm:$0xff]
  %v2341 = vld [vmem:[%s3 + $0x100] sm:$0xff]
  %v2342 = vld [vmem:[%s3 + $0x108] sm:$0xff]
  %v2343 = vld [vmem:[%s3 + $0x110] sm:$0xff]
  %v2344 = vld [vmem:[%s3 + $0x118] sm:$0xff]
  %v2345 = vld [vmem:[%s3 + $0x120] sm:$0xff]
  %v2346 = vld [vmem:[%s3 + $0x128] sm:$0xff]
  %v2347 = vld [vmem:[%s3 + $0x130] sm:$0xff]
  %v2348 = vld [vmem:[%s3 + $0x138] sm:$0xff]
  %v2349 = vld [vmem:[%s3 + $0x140] sm:$0xff]
  %v2350 = vld [vmem:[%s3 + $0x148] sm:$0xff]
  %v2351 = vld [vmem:[%s3 + $0x150] sm:$0xff]
  %v2352 = vld [vmem:[%s3 + $0x158] sm:$0xff]
  %v2353 = vld [vmem:[%s3 + $0x160] sm:$0xff]
  %v2354 = vld [vmem:[%s3 + $0x168] sm:$0xff]
  %v2355 = vld [vmem:[%s3 + $0x170] sm:$0xff]
  %v2356 = vld [vmem:[%s3 + $0x178] sm:$0xff]
  %v2357 = vld [vmem:[%s3 + $0x180] sm:$0xff]
  %v2358 = vld [vmem:[%s3 + $0x188] sm:$0xff]
  %v2359 = vmul.f32 %v1818, %v2309
  %v2360 = vmul.f32 %v1828, %v2310
  %v2361 = vmul.f32 %v1838, %v2311
  %v2362 = vmul.f32 %v1848, %v2312
  %v2363 = vmul.f32 %v1858, %v2313
  %v2364 = vmul.f32 %v1868, %v2314
  %v2365 = vmul.f32 %v1878, %v2315
  %v2366 = vmul.f32 %v1888, %v2316
  %v2367 = vmul.f32 %v1898, %v2317
  %v2368 = vmul.f32 %v1908, %v2318
  %v2369 = vmul.f32 %v1918, %v2319
  %v2370 = vmul.f32 %v1928, %v2320
  %v2371 = vmul.f32 %v1938, %v2321
  %v2372 = vmul.f32 %v1948, %v2322
  %v2373 = vmul.f32 %v1958, %v2323
  %v2374 = vmul.f32 %v1968, %v2324
  %v2375 = vmul.f32 %v1978, %v2325
  %v2376 = vmul.f32 %v1988, %v2326
  %v2377 = vmul.f32 %v1998, %v2327
  %v2378 = vmul.f32 %v2008, %v2328
  %v2379 = vmul.f32 %v2018, %v2329
  %v2380 = vmul.f32 %v2028, %v2330
  %v2381 = vmul.f32 %v2038, %v2331
  %v2382 = vmul.f32 %v2048, %v2332
  %v2383 = vmul.f32 %v2058, %v2333
  %v2384 = vmul.f32 %v2068, %v2334
  %v2385 = vmul.f32 %v2078, %v2335
  %v2386 = vmul.f32 %v2088, %v2336
  %v2387 = vmul.f32 %v2098, %v2337
  %v2388 = vmul.f32 %v2108, %v2338
  %v2389 = vmul.f32 %v2118, %v2339
  %v2390 = vmul.f32 %v2128, %v2340
  %v2391 = vmul.f32 %v2138, %v2341
  %v2392 = vmul.f32 %v2148, %v2342
  %v2393 = vmul.f32 %v2158, %v2343
  %v2394 = vmul.f32 %v2168, %v2344
  %v2395 = vmul.f32 %v2178, %v2345
  %v2396 = vmul.f32 %v2188, %v2346
  %v2397 = vmul.f32 %v2198, %v2347
  %v2398 = vmul.f32 %v2208, %v2348
  %v2399 = vmul.f32 %v2218, %v2349
  %v2400 = vmul.f32 %v2228, %v2350
  %v2401 = vmul.f32 %v2238, %v2351
  %v2402 = vmul.f32 %v2248, %v2352
  %v2403 = vmul.f32 %v2258, %v2353
  %v2404 = vmul.f32 %v2268, %v2354
  %v2405 = vmul.f32 %v2278, %v2355
  %v2406 = vmul.f32 %v2288, %v2356
  %v2407 = vmul.f32 %v2298, %v2357
  %v2408 = vmul.f32 %v2308, %v2358
  %v2409 = vld [vmem:[%s4] sm:$0xff]
  %v2410 = vld [vmem:[%s4 + $0x8] sm:$0xff]
  %v2411 = vld [vmem:[%s4 + $0x10] sm:$0xff]
  %v2412 = vld [vmem:[%s4 + $0x18] sm:$0xff]
  %v2413 = vld [vmem:[%s4 + $0x20] sm:$0xff]
  %v2414 = vld [vmem:[%s4 + $0x28] sm:$0xff]
  %v2415 = vld [vmem:[%s4 + $0x30] sm:$0xff]
  %v2416 = vld [vmem:[%s4 + $0x38] sm:$0xff]
  %v2417 = vld [vmem:[%s4 + $0x40] sm:$0xff]
  %v2418 = vld [vmem:[%s4 + $0x48] sm:$0xff]
  %v2419 = vld [vmem:[%s4 + $0x50] sm:$0xff]
  %v2420 = vld [vmem:[%s4 + $0x58] sm:$0xff]
  %v2421 = vld [vmem:[%s4 + $0x60] sm:$0xff]
  %v2422 = vld [vmem:[%s4 + $0x68] sm:$0xff]
  %v2423 = vld [vmem:[%s4 + $0x70] sm:$0xff]
  %v2424 = vld [vmem:[%s4 + $0x78] sm:$0xff]
  %v2425 = vld [vmem:[%s4 + $0x80] sm:$0xff]
  %v2426 = vld [vmem:[%s4 + $0x88] sm:$0xff]
  %v2427 = vld [vmem:[%s4 + $0x90] sm:$0xff]
  %v2428 = vld [vmem:[%s4 + $0x98] sm:$0xff]
  %v2429 = vld [vmem:[%s4 + $0xa0] sm:$0xff]
  %v2430 = vld [vmem:[%s4 + $0xa8] sm:$0xff]
  %v2431 = vld [vmem:[%s4 + $0xb0] sm:$0xff]
  %v2432 = vld [vmem:[%s4 + $0xb8] sm:$0xff]
  %v2433 = vld [vmem:[%s4 + $0xc0] sm:$0xff]
  %v2434 = vld [vmem:[%s4 + $0xc8] sm:$0xff]
  %v2435 = vld [vmem:[%s4 + $0xd0] sm:$0xff]
  %v2436 = vld [vmem:[%s4 + $0xd8] sm:$0xff]
  %v2437 = vld [vmem:[%s4 + $0xe0] sm:$0xff]
  %v2438 = vld [vmem:[%s4 + $0xe8] sm:$0xff]
  %v2439 = vld [vmem:[%s4 + $0xf0] sm:$0xff]
  %v2440 = vld [vmem:[%s4 + $0xf8] sm:$0xff]
  %v2441 = vld [vmem:[%s4 + $0x100] sm:$0xff]
  %v2442 = vld [vmem:[%s4 + $0x108] sm:$0xff]
  %v2443 = vld [vmem:[%s4 + $0x110] sm:$0xff]
  %v2444 = vld [vmem:[%s4 + $0x118] sm:$0xff]
  %v2445 = vld [vmem:[%s4 + $0x120] sm:$0xff]
  %v2446 = vld [vmem:[%s4 + $0x128] sm:$0xff]
  %v2447 = vld [vmem:[%s4 + $0x130] sm:$0xff]
  %v2448 = vld [vmem:[%s4 + $0x138] sm:$0xff]
  %v2449 = vld [vmem:[%s4 + $0x140] sm:$0xff]
  %v2450 = vld [vmem:[%s4 + $0x148] sm:$0xff]
  %v2451 = vld [vmem:[%s4 + $0x150] sm:$0xff]
  %v2452 = vld [vmem:[%s4 + $0x158] sm:$0xff]
  %v2453 = vld [vmem:[%s4 + $0x160] sm:$0xff]
  %v2454 = vld [vmem:[%s4 + $0x168] sm:$0xff]
  %v2455 = vld [vmem:[%s4 + $0x170] sm:$0xff]
  %v2456 = vld [vmem:[%s4 + $0x178] sm:$0xff]
  %v2457 = vld [vmem:[%s4 + $0x180] sm:$0xff]
  %v2458 = vld [vmem:[%s4 + $0x188] sm:$0xff]
  %v2459 = vmul.f32 %v1309, %v2359
  %v2460 = vmul.f32 %v1310, %v2360
  %v2461 = vmul.f32 %v1311, %v2361
  %v2462 = vmul.f32 %v1312, %v2362
  %v2463 = vmul.f32 %v1313, %v2363
  %v2464 = vmul.f32 %v1314, %v2364
  %v2465 = vmul.f32 %v1315, %v2365
  %v2466 = vmul.f32 %v1316, %v2366
  %v2467 = vmul.f32 %v1317, %v2367
  %v2468 = vmul.f32 %v1318, %v2368
  %v2469 = vmul.f32 %v1319, %v2369
  %v2470 = vmul.f32 %v1320, %v2370
  %v2471 = vmul.f32 %v1321, %v2371
  %v2472 = vmul.f32 %v1322, %v2372
  %v2473 = vmul.f32 %v1323, %v2373
  %v2474 = vmul.f32 %v1324, %v2374
  %v2475 = vmul.f32 %v1325, %v2375
  %v2476 = vmul.f32 %v1326, %v2376
  %v2477 = vmul.f32 %v1327, %v2377
  %v2478 = vmul.f32 %v1328, %v2378
  %v2479 = vmul.f32 %v1329, %v2379
  %v2480 = vmul.f32 %v1330, %v2380
  %v2481 = vmul.f32 %v1331, %v2381
  %v2482 = vmul.f32 %v1332, %v2382
  %v2483 = vmul.f32 %v1333, %v2383
  %v2484 = vmul.f32 %v1334, %v2384
  %v2485 = vmul.f32 %v1335, %v2385
  %v2486 = vmul.f32 %v1336, %v2386
  %v2487 = vmul.f32 %v1337, %v2387
  %v2488 = vmul.f32 %v1338, %v2388
  %v2489 = vmul.f32 %v1339, %v2389
  %v2490 = vmul.f32 %v1340, %v2390
  %v2491 = vmul.f32 %v1341, %v2391
  %v2492 = vmul.f32 %v1342, %v2392
  %v2493 = vmul.f32 %v1343, %v2393
  %v2494 = vmul.f32 %v1344, %v2394
  %v2495 = vmul.f32 %v1345, %v2395
  %v2496 = vmul.f32 %v1346, %v2396
  %v2497 = vmul.f32 %v1347, %v2397
  %v2498 = vmul.f32 %v1348, %v2398
  %v2499 = vmul.f32 %v1349, %v2399
  %v2500 = vmul.f32 %v1350, %v2400
  %v2501 = vmul.f32 %v1351, %v2401
  %v2502 = vmul.f32 %v1352, %v2402
  %v2503 = vmul.f32 %v1353, %v2403
  %v2504 = vmul.f32 %v1354, %v2404
  %v2505 = vmul.f32 %v1355, %v2405
  %v2506 = vmul.f32 %v1356, %v2406
  %v2507 = vmul.f32 %v1357, %v2407
  %v2508 = vmul.f32 %v1358, %v2408
  %v2509 = vsub.f32 %v2409, %v2459
  %v2510 = vsub.f32 %v2410, %v2460
  %v2511 = vsub.f32 %v2411, %v2461
  %v2512 = vsub.f32 %v2412, %v2462
  %v2513 = vsub.f32 %v2413, %v2463
  %v2514 = vsub.f32 %v2414, %v2464
  %v2515 = vsub.f32 %v2415, %v2465
  %v2516 = vsub.f32 %v2416, %v2466
  %v2517 = vsub.f32 %v2417, %v2467
  %v2518 = vsub.f32 %v2418, %v2468
  %v2519 = vsub.f32 %v2419, %v2469
  %v2520 = vsub.f32 %v2420, %v2470
  %v2521 = vsub.f32 %v2421, %v2471
  %v2522 = vsub.f32 %v2422, %v2472
  %v2523 = vsub.f32 %v2423, %v2473
  %v2524 = vsub.f32 %v2424, %v2474
  %v2525 = vsub.f32 %v2425, %v2475
  %v2526 = vsub.f32 %v2426, %v2476
  %v2527 = vsub.f32 %v2427, %v2477
  %v2528 = vsub.f32 %v2428, %v2478
  %v2529 = vsub.f32 %v2429, %v2479
  %v2530 = vsub.f32 %v2430, %v2480
  %v2531 = vsub.f32 %v2431, %v2481
  %v2532 = vsub.f32 %v2432, %v2482
  %v2533 = vsub.f32 %v2433, %v2483
  %v2534 = vsub.f32 %v2434, %v2484
  %v2535 = vsub.f32 %v2435, %v2485
  %v2536 = vsub.f32 %v2436, %v2486
  %v2537 = vsub.f32 %v2437, %v2487
  %v2538 = vsub.f32 %v2438, %v2488
  %v2539 = vsub.f32 %v2439, %v2489
  %v2540 = vsub.f32 %v2440, %v2490
  %v2541 = vsub.f32 %v2441, %v2491
  %v2542 = vsub.f32 %v2442, %v2492
  %v2543 = vsub.f32 %v2443, %v2493
  %v2544 = vsub.f32 %v2444, %v2494
  %v2545 = vsub.f32 %v2445, %v2495
  %v2546 = vsub.f32 %v2446, %v2496
  %v2547 = vsub.f32 %v2447, %v2497
  %v2548 = vsub.f32 %v2448, %v2498
  %v2549 = vsub.f32 %v2449, %v2499
  %v2550 = vsub.f32 %v2450, %v2500
  %v2551 = vsub.f32 %v2451, %v2501
  %v2552 = vsub.f32 %v2452, %v2502
  %v2553 = vsub.f32 %v2453, %v2503
  %v2554 = vsub.f32 %v2454, %v2504
  %v2555 = vsub.f32 %v2455, %v2505
  %v2556 = vsub.f32 %v2456, %v2506
  %v2557 = vsub.f32 %v2457, %v2507
  %v2558 = vsub.f32 %v2458, %v2508
  %2560 = vset.pattern.permute.xlu0 0
  %2561 = vperm.xlu0 %2560, %v2359
  %v2562 = vpop.permute.xlu0 %2561
  %2565 = vset.pattern.permute.xlu0 0
  %2566 = vperm.xlu0 %2565, %v2360
  %v2567 = vpop.permute.xlu0 %2566
  %2570 = vset.pattern.permute.xlu0 0
  %2571 = vperm.xlu0 %2570, %v2361
  %v2572 = vpop.permute.xlu0 %2571
  %2575 = vset.pattern.permute.xlu0 0
  %2576 = vperm.xlu0 %2575, %v2362
  %v2577 = vpop.permute.xlu0 %2576
  %2580 = vset.pattern.permute.xlu0 0
  %2581 = vperm.xlu0 %2580, %v2363
  %v2582 = vpop.permute.xlu0 %2581
  %2585 = vset.pattern.permute.xlu0 0
  %2586 = vperm.xlu0 %2585, %v2364
  %v2587 = vpop.permute.xlu0 %2586
  %2590 = vset.pattern.permute.xlu0 0
  %2591 = vperm.xlu0 %2590, %v2365
  %v2592 = vpop.permute.xlu0 %2591
  %2595 = vset.pattern.permute.xlu0 0
  %2596 = vperm.xlu0 %2595, %v2366
  %v2597 = vpop.permute.xlu0 %2596
  %2600 = vset.pattern.permute.xlu0 0
  %2601 = vperm.xlu0 %2600, %v2367
  %v2602 = vpop.permute.xlu0 %2601
  %2605 = vset.pattern.permute.xlu0 0
  %2606 = vperm.xlu0 %2605, %v2368
  %v2607 = vpop.permute.xlu0 %2606
  %2610 = vset.pattern.permute.xlu0 0
  %2611 = vperm.xlu0 %2610, %v2369
  %v2612 = vpop.permute.xlu0 %2611
  %2615 = vset.pattern.permute.xlu0 0
  %2616 = vperm.xlu0 %2615, %v2370
  %v2617 = vpop.permute.xlu0 %2616
  %2620 = vset.pattern.permute.xlu0 0
  %2621 = vperm.xlu0 %2620, %v2371
  %v2622 = vpop.permute.xlu0 %2621
  %2625 = vset.pattern.permute.xlu0 0
  %2626 = vperm.xlu0 %2625, %v2372
  %v2627 = vpop.permute.xlu0 %2626
  %2630 = vset.pattern.permute.xlu0 0
  %2631 = vperm.xlu0 %2630, %v2373
  %v2632 = vpop.permute.xlu0 %2631
  %2635 = vset.pattern.permute.xlu0 0
  %2636 = vperm.xlu0 %2635, %v2374
  %v2637 = vpop.permute.xlu0 %2636
  %2640 = vset.pattern.permute.xlu0 0
  %2641 = vperm.xlu0 %2640, %v2375
  %v2642 = vpop.permute.xlu0 %2641
  %2645 = vset.pattern.permute.xlu0 0
  %2646 = vperm.xlu0 %2645, %v2376
  %v2647 = vpop.permute.xlu0 %2646
  %2650 = vset.pattern.permute.xlu0 0
  %2651 = vperm.xlu0 %2650, %v2377
  %v2652 = vpop.permute.xlu0 %2651
  %2655 = vset.pattern.permute.xlu0 0
  %2656 = vperm.xlu0 %2655, %v2378
  %v2657 = vpop.permute.xlu0 %2656
  %2660 = vset.pattern.permute.xlu0 0
  %2661 = vperm.xlu0 %2660, %v2379
  %v2662 = vpop.permute.xlu0 %2661
  %2665 = vset.pattern.permute.xlu0 0
  %2666 = vperm.xlu0 %2665, %v2380
  %v2667 = vpop.permute.xlu0 %2666
  %2670 = vset.pattern.permute.xlu0 0
  %2671 = vperm.xlu0 %2670, %v2381
  %v2672 = vpop.permute.xlu0 %2671
  %2675 = vset.pattern.permute.xlu0 0
  %2676 = vperm.xlu0 %2675, %v2382
  %v2677 = vpop.permute.xlu0 %2676
  %2680 = vset.pattern.permute.xlu0 0
  %2681 = vperm.xlu0 %2680, %v2383
  %v2682 = vpop.permute.xlu0 %2681
  %2685 = vset.pattern.permute.xlu0 0
  %2686 = vperm.xlu0 %2685, %v2384
  %v2687 = vpop.permute.xlu0 %2686
  %2690 = vset.pattern.permute.xlu0 0
  %2691 = vperm.xlu0 %2690, %v2385
  %v2692 = vpop.permute.xlu0 %2691
  %2695 = vset.pattern.permute.xlu0 0
  %2696 = vperm.xlu0 %2695, %v2386
  %v2697 = vpop.permute.xlu0 %2696
  %2700 = vset.pattern.permute.xlu0 0
  %2701 = vperm.xlu0 %2700, %v2387
  %v2702 = vpop.permute.xlu0 %2701
  %2705 = vset.pattern.permute.xlu0 0
  %2706 = vperm.xlu0 %2705, %v2388
  %v2707 = vpop.permute.xlu0 %2706
  %2710 = vset.pattern.permute.xlu0 0
  %2711 = vperm.xlu0 %2710, %v2389
  %v2712 = vpop.permute.xlu0 %2711
  %2715 = vset.pattern.permute.xlu0 0
  %2716 = vperm.xlu0 %2715, %v2390
  %v2717 = vpop.permute.xlu0 %2716
  %2720 = vset.pattern.permute.xlu0 0
  %2721 = vperm.xlu0 %2720, %v2391
  %v2722 = vpop.permute.xlu0 %2721
  %2725 = vset.pattern.permute.xlu0 0
  %2726 = vperm.xlu0 %2725, %v2392
  %v2727 = vpop.permute.xlu0 %2726
  %2730 = vset.pattern.permute.xlu0 0
  %2731 = vperm.xlu0 %2730, %v2393
  %v2732 = vpop.permute.xlu0 %2731
  %2735 = vset.pattern.permute.xlu0 0
  %2736 = vperm.xlu0 %2735, %v2394
  %v2737 = vpop.permute.xlu0 %2736
  %2740 = vset.pattern.permute.xlu0 0
  %2741 = vperm.xlu0 %2740, %v2395
  %v2742 = vpop.permute.xlu0 %2741
  %2745 = vset.pattern.permute.xlu0 0
  %2746 = vperm.xlu0 %2745, %v2396
  %v2747 = vpop.permute.xlu0 %2746
  %2750 = vset.pattern.permute.xlu0 0
  %2751 = vperm.xlu0 %2750, %v2397
  %v2752 = vpop.permute.xlu0 %2751
  %2755 = vset.pattern.permute.xlu0 0
  %2756 = vperm.xlu0 %2755, %v2398
  %v2757 = vpop.permute.xlu0 %2756
  %2760 = vset.pattern.permute.xlu0 0
  %2761 = vperm.xlu0 %2760, %v2399
  %v2762 = vpop.permute.xlu0 %2761
  %2765 = vset.pattern.permute.xlu0 0
  %2766 = vperm.xlu0 %2765, %v2400
  %v2767 = vpop.permute.xlu0 %2766
  %2770 = vset.pattern.permute.xlu0 0
  %2771 = vperm.xlu0 %2770, %v2401
  %v2772 = vpop.permute.xlu0 %2771
  %2775 = vset.pattern.permute.xlu0 0
  %2776 = vperm.xlu0 %2775, %v2402
  %v2777 = vpop.permute.xlu0 %2776
  %2780 = vset.pattern.permute.xlu0 0
  %2781 = vperm.xlu0 %2780, %v2403
  %v2782 = vpop.permute.xlu0 %2781
  %2785 = vset.pattern.permute.xlu0 0
  %2786 = vperm.xlu0 %2785, %v2404
  %v2787 = vpop.permute.xlu0 %2786
  %2790 = vset.pattern.permute.xlu0 0
  %2791 = vperm.xlu0 %2790, %v2405
  %v2792 = vpop.permute.xlu0 %2791
  %2795 = vset.pattern.permute.xlu0 0
  %2796 = vperm.xlu0 %2795, %v2406
  %v2797 = vpop.permute.xlu0 %2796
  %2800 = vset.pattern.permute.xlu0 0
  %2801 = vperm.xlu0 %2800, %v2407
  %v2802 = vpop.permute.xlu0 %2801
  %2805 = vset.pattern.permute.xlu0 0
  %2806 = vperm.xlu0 %2805, %v2408
  %v2807 = vpop.permute.xlu0 %2806
  %v2809 = vmul.f32 %v1034, %v2562
  %v2810 = vmul.f32 %v1036, %v2567
  %v2811 = vmul.f32 %v1039, %v2572
  %v2812 = vmul.f32 %v1041, %v2577
  %v2813 = vmul.f32 %v1044, %v2582
  %v2814 = vmul.f32 %v1046, %v2587
  %v2815 = vmul.f32 %v1049, %v2592
  %v2816 = vmul.f32 %v1051, %v2597
  %v2817 = vmul.f32 %v1054, %v2602
  %v2818 = vmul.f32 %v1056, %v2607
  %v2819 = vmul.f32 %v1059, %v2612
  %v2820 = vmul.f32 %v1061, %v2617
  %v2821 = vmul.f32 %v1064, %v2622
  %v2822 = vmul.f32 %v1066, %v2627
  %v2823 = vmul.f32 %v1069, %v2632
  %v2824 = vmul.f32 %v1071, %v2637
  %v2825 = vmul.f32 %v1074, %v2642
  %v2826 = vmul.f32 %v1076, %v2647
  %v2827 = vmul.f32 %v1079, %v2652
  %v2828 = vmul.f32 %v1081, %v2657
  %v2829 = vmul.f32 %v1084, %v2662
  %v2830 = vmul.f32 %v1086, %v2667
  %v2831 = vmul.f32 %v1089, %v2672
  %v2832 = vmul.f32 %v1091, %v2677
  %v2833 = vmul.f32 %v1094, %v2682
  %v2834 = vmul.f32 %v1096, %v2687
  %v2835 = vmul.f32 %v1099, %v2692
  %v2836 = vmul.f32 %v1101, %v2697
  %v2837 = vmul.f32 %v1104, %v2702
  %v2838 = vmul.f32 %v1106, %v2707
  %v2839 = vmul.f32 %v1109, %v2712
  %v2840 = vmul.f32 %v1111, %v2717
  %v2841 = vmul.f32 %v1114, %v2722
  %v2842 = vmul.f32 %v1116, %v2727
  %v2843 = vmul.f32 %v1119, %v2732
  %v2844 = vmul.f32 %v1121, %v2737
  %v2845 = vmul.f32 %v1124, %v2742
  %v2846 = vmul.f32 %v1126, %v2747
  %v2847 = vmul.f32 %v1129, %v2752
  %v2848 = vmul.f32 %v1131, %v2757
  %v2849 = vmul.f32 %v1134, %v2762
  %v2850 = vmul.f32 %v1136, %v2767
  %v2851 = vmul.f32 %v1139, %v2772
  %v2852 = vmul.f32 %v1141, %v2777
  %v2853 = vmul.f32 %v1144, %v2782
  %v2854 = vmul.f32 %v1146, %v2787
  %v2855 = vmul.f32 %v1149, %v2792
  %v2856 = vmul.f32 %v1151, %v2797
  %v2857 = vmul.f32 %v1154, %v2802
  %v2858 = vmul.f32 %v1156, %v2807
  %2860 = vset.pattern.permute.xlu0 0
  %2861 = vperm.xlu0 %2860, %v2509
  %v2862 = vpop.permute.xlu0 %2861
  %2865 = vset.pattern.permute.xlu0 0
  %2866 = vperm.xlu0 %2865, %v2510
  %v2867 = vpop.permute.xlu0 %2866
  %2870 = vset.pattern.permute.xlu0 0
  %2871 = vperm.xlu0 %2870, %v2511
  %v2872 = vpop.permute.xlu0 %2871
  %2875 = vset.pattern.permute.xlu0 0
  %2876 = vperm.xlu0 %2875, %v2512
  %v2877 = vpop.permute.xlu0 %2876
  %2880 = vset.pattern.permute.xlu0 0
  %2881 = vperm.xlu0 %2880, %v2513
  %v2882 = vpop.permute.xlu0 %2881
  %2885 = vset.pattern.permute.xlu0 0
  %2886 = vperm.xlu0 %2885, %v2514
  %v2887 = vpop.permute.xlu0 %2886
  %2890 = vset.pattern.permute.xlu0 0
  %2891 = vperm.xlu0 %2890, %v2515
  %v2892 = vpop.permute.xlu0 %2891
  %2895 = vset.pattern.permute.xlu0 0
  %2896 = vperm.xlu0 %2895, %v2516
  %v2897 = vpop.permute.xlu0 %2896
  %2900 = vset.pattern.permute.xlu0 0
  %2901 = vperm.xlu0 %2900, %v2517
  %v2902 = vpop.permute.xlu0 %2901
  %2905 = vset.pattern.permute.xlu0 0
  %2906 = vperm.xlu0 %2905, %v2518
  %v2907 = vpop.permute.xlu0 %2906
  %2910 = vset.pattern.permute.xlu0 0
  %2911 = vperm.xlu0 %2910, %v2519
  %v2912 = vpop.permute.xlu0 %2911
  %2915 = vset.pattern.permute.xlu0 0
  %2916 = vperm.xlu0 %2915, %v2520
  %v2917 = vpop.permute.xlu0 %2916
  %2920 = vset.pattern.permute.xlu0 0
  %2921 = vperm.xlu0 %2920, %v2521
  %v2922 = vpop.permute.xlu0 %2921
  %2925 = vset.pattern.permute.xlu0 0
  %2926 = vperm.xlu0 %2925, %v2522
  %v2927 = vpop.permute.xlu0 %2926
  %2930 = vset.pattern.permute.xlu0 0
  %2931 = vperm.xlu0 %2930, %v2523
  %v2932 = vpop.permute.xlu0 %2931
  %2935 = vset.pattern.permute.xlu0 0
  %2936 = vperm.xlu0 %2935, %v2524
  %v2937 = vpop.permute.xlu0 %2936
  %2940 = vset.pattern.permute.xlu0 0
  %2941 = vperm.xlu0 %2940, %v2525
  %v2942 = vpop.permute.xlu0 %2941
  %2945 = vset.pattern.permute.xlu0 0
  %2946 = vperm.xlu0 %2945, %v2526
  %v2947 = vpop.permute.xlu0 %2946
  %2950 = vset.pattern.permute.xlu0 0
  %2951 = vperm.xlu0 %2950, %v2527
  %v2952 = vpop.permute.xlu0 %2951
  %2955 = vset.pattern.permute.xlu0 0
  %2956 = vperm.xlu0 %2955, %v2528
  %v2957 = vpop.permute.xlu0 %2956
  %2960 = vset.pattern.permute.xlu0 0
  %2961 = vperm.xlu0 %2960, %v2529
  %v2962 = vpop.permute.xlu0 %2961
  %2965 = vset.pattern.permute.xlu0 0
  %2966 = vperm.xlu0 %2965, %v2530
  %v2967 = vpop.permute.xlu0 %2966
  %2970 = vset.pattern.permute.xlu0 0
  %2971 = vperm.xlu0 %2970, %v2531
  %v2972 = vpop.permute.xlu0 %2971
  %2975 = vset.pattern.permute.xlu0 0
  %2976 = vperm.xlu0 %2975, %v2532
  %v2977 = vpop.permute.xlu0 %2976
  %2980 = vset.pattern.permute.xlu0 0
  %2981 = vperm.xlu0 %2980, %v2533
  %v2982 = vpop.permute.xlu0 %2981
  %2985 = vset.pattern.permute.xlu0 0
  %2986 = vperm.xlu0 %2985, %v2534
  %v2987 = vpop.permute.xlu0 %2986
  %2990 = vset.pattern.permute.xlu0 0
  %2991 = vperm.xlu0 %2990, %v2535
  %v2992 = vpop.permute.xlu0 %2991
  %2995 = vset.pattern.permute.xlu0 0
  %2996 = vperm.xlu0 %2995, %v2536
  %v2997 = vpop.permute.xlu0 %2996
  %3000 = vset.pattern.permute.xlu0 0
  %3001 = vperm.xlu0 %3000, %v2537
  %v3002 = vpop.permute.xlu0 %3001
  %3005 = vset.pattern.permute.xlu0 0
  %3006 = vperm.xlu0 %3005, %v2538
  %v3007 = vpop.permute.xlu0 %3006
  %3010 = vset.pattern.permute.xlu0 0
  %3011 = vperm.xlu0 %3010, %v2539
  %v3012 = vpop.permute.xlu0 %3011
  %3015 = vset.pattern.permute.xlu0 0
  %3016 = vperm.xlu0 %3015, %v2540
  %v3017 = vpop.permute.xlu0 %3016
  %3020 = vset.pattern.permute.xlu0 0
  %3021 = vperm.xlu0 %3020, %v2541
  %v3022 = vpop.permute.xlu0 %3021
  %3025 = vset.pattern.permute.xlu0 0
  %3026 = vperm.xlu0 %3025, %v2542
  %v3027 = vpop.permute.xlu0 %3026
  %3030 = vset.pattern.permute.xlu0 0
  %3031 = vperm.xlu0 %3030, %v2543
  %v3032 = vpop.permute.xlu0 %3031
  %3035 = vset.pattern.permute.xlu0 0
  %3036 = vperm.xlu0 %3035, %v2544
  %v3037 = vpop.permute.xlu0 %3036
  %3040 = vset.pattern.permute.xlu0 0
  %3041 = vperm.xlu0 %3040, %v2545
  %v3042 = vpop.permute.xlu0 %3041
  %3045 = vset.pattern.permute.xlu0 0
  %3046 = vperm.xlu0 %3045, %v2546
  %v3047 = vpop.permute.xlu0 %3046
  %3050 = vset.pattern.permute.xlu0 0
  %3051 = vperm.xlu0 %3050, %v2547
  %v3052 = vpop.permute.xlu0 %3051
  %3055 = vset.pattern.permute.xlu0 0
  %3056 = vperm.xlu0 %3055, %v2548
  %v3057 = vpop.permute.xlu0 %3056
  %3060 = vset.pattern.permute.xlu0 0
  %3061 = vperm.xlu0 %3060, %v2549
  %v3062 = vpop.permute.xlu0 %3061
  %3065 = vset.pattern.permute.xlu0 0
  %3066 = vperm.xlu0 %3065, %v2550
  %v3067 = vpop.permute.xlu0 %3066
  %3070 = vset.pattern.permute.xlu0 0
  %3071 = vperm.xlu0 %3070, %v2551
  %v3072 = vpop.permute.xlu0 %3071
  %3075 = vset.pattern.permute.xlu0 0
  %3076 = vperm.xlu0 %3075, %v2552
  %v3077 = vpop.permute.xlu0 %3076
  %3080 = vset.pattern.permute.xlu0 0
  %3081 = vperm.xlu0 %3080, %v2553
  %v3082 = vpop.permute.xlu0 %3081
  %3085 = vset.pattern.permute.xlu0 0
  %3086 = vperm.xlu0 %3085, %v2554
  %v3087 = vpop.permute.xlu0 %3086
  %3090 = vset.pattern.permute.xlu0 0
  %3091 = vperm.xlu0 %3090, %v2555
  %v3092 = vpop.permute.xlu0 %3091
  %3095 = vset.pattern.permute.xlu0 0
  %3096 = vperm.xlu0 %3095, %v2556
  %v3097 = vpop.permute.xlu0 %3096
  %3100 = vset.pattern.permute.xlu0 0
  %3101 = vperm.xlu0 %3100, %v2557
  %v3102 = vpop.permute.xlu0 %3101
  %3105 = vset.pattern.permute.xlu0 0
  %3106 = vperm.xlu0 %3105, %v2558
  %v3107 = vpop.permute.xlu0 %3106
  %v3109 = vadd.f32 %v2809, %v2862
  %v3110 = vadd.f32 %v2810, %v2867
  %v3111 = vadd.f32 %v2811, %v2872
  %v3112 = vadd.f32 %v2812, %v2877
  %v3113 = vadd.f32 %v2813, %v2882
  %v3114 = vadd.f32 %v2814, %v2887
  %v3115 = vadd.f32 %v2815, %v2892
  %v3116 = vadd.f32 %v2816, %v2897
  %v3117 = vadd.f32 %v2817, %v2902
  %v3118 = vadd.f32 %v2818, %v2907
  %v3119 = vadd.f32 %v2819, %v2912
  %v3120 = vadd.f32 %v2820, %v2917
  %v3121 = vadd.f32 %v2821, %v2922
  %v3122 = vadd.f32 %v2822, %v2927
  %v3123 = vadd.f32 %v2823, %v2932
  %v3124 = vadd.f32 %v2824, %v2937
  %v3125 = vadd.f32 %v2825, %v2942
  %v3126 = vadd.f32 %v2826, %v2947
  %v3127 = vadd.f32 %v2827, %v2952
  %v3128 = vadd.f32 %v2828, %v2957
  %v3129 = vadd.f32 %v2829, %v2962
  %v3130 = vadd.f32 %v2830, %v2967
  %v3131 = vadd.f32 %v2831, %v2972
  %v3132 = vadd.f32 %v2832, %v2977
  %v3133 = vadd.f32 %v2833, %v2982
  %v3134 = vadd.f32 %v2834, %v2987
  %v3135 = vadd.f32 %v2835, %v2992
  %v3136 = vadd.f32 %v2836, %v2997
  %v3137 = vadd.f32 %v2837, %v3002
  %v3138 = vadd.f32 %v2838, %v3007
  %v3139 = vadd.f32 %v2839, %v3012
  %v3140 = vadd.f32 %v2840, %v3017
  %v3141 = vadd.f32 %v2841, %v3022
  %v3142 = vadd.f32 %v2842, %v3027
  %v3143 = vadd.f32 %v2843, %v3032
  %v3144 = vadd.f32 %v2844, %v3037
  %v3145 = vadd.f32 %v2845, %v3042
  %v3146 = vadd.f32 %v2846, %v3047
  %v3147 = vadd.f32 %v2847, %v3052
  %v3148 = vadd.f32 %v2848, %v3057
  %v3149 = vadd.f32 %v2849, %v3062
  %v3150 = vadd.f32 %v2850, %v3067
  %v3151 = vadd.f32 %v2851, %v3072
  %v3152 = vadd.f32 %v2852, %v3077
  %v3153 = vadd.f32 %v2853, %v3082
  %v3154 = vadd.f32 %v2854, %v3087
  %v3155 = vadd.f32 %v2855, %v3092
  %v3156 = vadd.f32 %v2856, %v3097
  %v3157 = vadd.f32 %v2857, %v3102
  %v3158 = vadd.f32 %v2858, %v3107
  %3159 = vst.msk [vmem:[%s5] sm:$0xff] %vm1158, %v3109
  %3160 = vst.msk [vmem:[%s5 + $0x8] sm:$0xff] %vm1158, %v3110
  %3161 = vst.msk [vmem:[%s5 + $0x10] sm:$0xff] %vm1158, %v3111
  %3162 = vst.msk [vmem:[%s5 + $0x18] sm:$0xff] %vm1158, %v3112
  %3163 = vst.msk [vmem:[%s5 + $0x20] sm:$0xff] %vm1158, %v3113
  %3164 = vst.msk [vmem:[%s5 + $0x28] sm:$0xff] %vm1158, %v3114
  %3165 = vst.msk [vmem:[%s5 + $0x30] sm:$0xff] %vm1158, %v3115
  %3166 = vst.msk [vmem:[%s5 + $0x38] sm:$0xff] %vm1158, %v3116
  %3167 = vst.msk [vmem:[%s5 + $0x40] sm:$0xff] %vm1158, %v3117
  %3168 = vst.msk [vmem:[%s5 + $0x48] sm:$0xff] %vm1158, %v3118
  %3169 = vst.msk [vmem:[%s5 + $0x50] sm:$0xff] %vm1158, %v3119
  %3170 = vst.msk [vmem:[%s5 + $0x58] sm:$0xff] %vm1158, %v3120
  %3171 = vst.msk [vmem:[%s5 + $0x60] sm:$0xff] %vm1158, %v3121
  %3172 = vst.msk [vmem:[%s5 + $0x68] sm:$0xff] %vm1158, %v3122
  %3173 = vst.msk [vmem:[%s5 + $0x70] sm:$0xff] %vm1158, %v3123
  %3174 = vst.msk [vmem:[%s5 + $0x78] sm:$0xff] %vm1158, %v3124
  %3175 = vst.msk [vmem:[%s5 + $0x80] sm:$0xff] %vm1158, %v3125
  %3176 = vst.msk [vmem:[%s5 + $0x88] sm:$0xff] %vm1158, %v3126
  %3177 = vst.msk [vmem:[%s5 + $0x90] sm:$0xff] %vm1158, %v3127
  %3178 = vst.msk [vmem:[%s5 + $0x98] sm:$0xff] %vm1158, %v3128
  %3179 = vst.msk [vmem:[%s5 + $0xa0] sm:$0xff] %vm1158, %v3129
  %3180 = vst.msk [vmem:[%s5 + $0xa8] sm:$0xff] %vm1158, %v3130
  %3181 = vst.msk [vmem:[%s5 + $0xb0] sm:$0xff] %vm1158, %v3131
  %3182 = vst.msk [vmem:[%s5 + $0xb8] sm:$0xff] %vm1158, %v3132
  %3183 = vst.msk [vmem:[%s5 + $0xc0] sm:$0xff] %vm1158, %v3133
  %3184 = vst.msk [vmem:[%s5 + $0xc8] sm:$0xff] %vm1158, %v3134
  %3185 = vst.msk [vmem:[%s5 + $0xd0] sm:$0xff] %vm1158, %v3135
  %3186 = vst.msk [vmem:[%s5 + $0xd8] sm:$0xff] %vm1158, %v3136
  %3187 = vst.msk [vmem:[%s5 + $0xe0] sm:$0xff] %vm1158, %v3137
  %3188 = vst.msk [vmem:[%s5 + $0xe8] sm:$0xff] %vm1158, %v3138
  %3189 = vst.msk [vmem:[%s5 + $0xf0] sm:$0xff] %vm1158, %v3139
  %3190 = vst.msk [vmem:[%s5 + $0xf8] sm:$0xff] %vm1158, %v3140
  %3191 = vst.msk [vmem:[%s5 + $0x100] sm:$0xff] %vm1158, %v3141
  %3192 = vst.msk [vmem:[%s5 + $0x108] sm:$0xff] %vm1158, %v3142
  %3193 = vst.msk [vmem:[%s5 + $0x110] sm:$0xff] %vm1158, %v3143
  %3194 = vst.msk [vmem:[%s5 + $0x118] sm:$0xff] %vm1158, %v3144
  %3195 = vst.msk [vmem:[%s5 + $0x120] sm:$0xff] %vm1158, %v3145
  %3196 = vst.msk [vmem:[%s5 + $0x128] sm:$0xff] %vm1158, %v3146
  %3197 = vst.msk [vmem:[%s5 + $0x130] sm:$0xff] %vm1158, %v3147
  %3198 = vst.msk [vmem:[%s5 + $0x138] sm:$0xff] %vm1158, %v3148
  %3199 = vst.msk [vmem:[%s5 + $0x140] sm:$0xff] %vm1158, %v3149
  %3200 = vst.msk [vmem:[%s5 + $0x148] sm:$0xff] %vm1158, %v3150
  %3201 = vst.msk [vmem:[%s5 + $0x150] sm:$0xff] %vm1158, %v3151
  %3202 = vst.msk [vmem:[%s5 + $0x158] sm:$0xff] %vm1158, %v3152
  %3203 = vst.msk [vmem:[%s5 + $0x160] sm:$0xff] %vm1158, %v3153
  %3204 = vst.msk [vmem:[%s5 + $0x168] sm:$0xff] %vm1158, %v3154
  %3205 = vst.msk [vmem:[%s5 + $0x170] sm:$0xff] %vm1158, %v3155
  %3206 = vst.msk [vmem:[%s5 + $0x178] sm:$0xff] %vm1158, %v3156
  %3207 = vst.msk [vmem:[%s5 + $0x180] sm:$0xff] %vm1158, %v3157
  %3208 = vst.msk [vmem:[%s5 + $0x188] sm:$0xff] %vm1158, %v3158
  // Predicated region
  $region22: #{fused_forward.1} parent=0 // pred_check
    _
  $region23: #{fused_forward.1} parent=0 // pred_check_branch
    %3210 = sbr.rel (0) target = $region25
  $region24: #{fused_forward.1} parent=0 // pred_region
    _
  $region25: #{fused_forward.1} parent=0 // pred_fallthru
    _
  // Predicated region
  $region26: #{fused_forward.1} parent=0 // pred_check
    _
  $region27: #{fused_forward.1} parent=0 // pred_check_branch
    %3212 = sbr.rel (0) target = $region29
  $region28: #{fused_forward.1} parent=0 // pred_region
    _
  $region29: #{fused_forward.1} parent=0 // pred_fallthru
    _

</llo_original>
